<compile_context>
chip_gen: v5e
topology: v5e:2x2
jax: 0.10.0
libtpu: 0.0.40
codegen_flags: <defaults>
</compile_context>

<pallas_src>
import functools

import jax
import jax.numpy as jnp
from jax import lax
from jax.experimental import pallas as pl
from jax.experimental.pallas import tpu as pltpu

# Cast only at the MXU boundary; elementwise gate math stays f32
# (v5e VPU/EUP have no bf16 path).
MXU_DTYPE = jnp.bfloat16

UNROLL_T_MAX = 32   # fully unroll the recurrence when T is at most this
MAX_B_CHUNK = 256   # cap the per-grid-step batch chunk


def harmonizer_kernel(ids_ref, proj_ref, whh_ref, wfc_ref, bfc_ref, out_ref,
                      xp_sc, *, T, Bc, H, NN_pad):
    TBc = T * Bc

    # ---- fused embedding lookup + input projection + bias (one MXU pass) ------
    ids = ids_ref[...]                                              # (TBc, 1) int32
    note_iota = lax.broadcasted_iota(jnp.int32, (TBc, NN_pad), 1)
    onehot = (note_iota == ids).astype(MXU_DTYPE)                   # (TBc, NN_pad)
    xp_sc[...] = jnp.dot(onehot, proj_ref[...],
                         preferred_element_type=jnp.float32
                         ).astype(xp_sc.dtype)                      # (TBc, 4H)

    # Hoist invariant weight loads out of the recurrence loop.
    whh = whh_ref[...]                                              # (H, 4H) bf16
    wfc = wfc_ref[...]                                              # (H, C_pad) bf16
    bfc = bfc_ref[...]                                              # (1, C_pad) f32

    # ---- LSTM recurrence; h/c live in vregs, FC fused into each step ----------
    def step(row_start, h_bf, c):
        xt = xp_sc[pl.ds(row_start, Bc), :].astype(jnp.float32)     # (Bc, 4H)
        gates = xt + jnp.dot(h_bf, whh, preferred_element_type=jnp.float32)
        # Offline gate order: (i, f, o, g) -> one sigmoid call + one tanh call.
        sig = jax.nn.sigmoid(gates[:, :3 * H])
        i_g = sig[:, 0 * H:1 * H]
        f_g = sig[:, 1 * H:2 * H]
        o_g = sig[:, 2 * H:3 * H]
        g_g = jnp.tanh(gates[:, 3 * H:4 * H])
        c_new = f_g * c + i_g * g_g
        h_new = o_g * jnp.tanh(c_new)
        h_new_bf = h_new.astype(MXU_DTYPE)
        # Fused output projection: lane-dense (Bc, C_pad) unmasked store.
        out_ref[pl.ds(row_start, Bc), :] = (
            jnp.dot(h_new_bf, wfc, preferred_element_type=jnp.float32) + bfc)
        return h_new_bf, c_new

    h0 = jnp.zeros((Bc, H), MXU_DTYPE)
    c0 = jnp.zeros((Bc, H), jnp.float32)

    if T <= UNROLL_T_MAX:
        h_bf, c = h0, c0
        for t in range(T):                                          # static unroll
            h_bf, c = step(t * Bc, h_bf, c)
    else:
        def body(t, carry):
            row = pl.multiple_of(t * Bc, Bc)
            return step(row, *carry)
        lax.fori_loop(0, T, body, (h0, c0))


def _reorder_gates(mat_4h_last):
    """Permute last-dim gate blocks from PyTorch's (i, f, g, o) to (i, f, o, g)."""
    i, f, g, o = jnp.split(mat_4h_last, 4, axis=-1)
    return jnp.concatenate([i, f, o, g], axis=-1)


def prepare_params(params):
    """One-time parameter preparation (hoisted out of the forward path)."""
    emb = params["embed"].astype(jnp.float32)         # (NN, E)
    w_ih = params["w_ih"].astype(jnp.float32)         # (4H, E)  gate order i,f,g,o
    w_hh = params["w_hh"].astype(jnp.float32)         # (4H, H)
    bias = (params["b_ih"] + params["b_hh"]).astype(jnp.float32)   # (4H,)
    w_fc = params["w_fc"].astype(jnp.float32)         # (C, H)
    b_fc = params["b_fc"].astype(jnp.float32)         # (C,)

    NN = emb.shape[0]
    H = w_hh.shape[1]
    C = w_fc.shape[0]
    C_pad = pl.cdiv(C, 128) * 128                     # lane-dense output width
    NN_pad = pl.cdiv(NN, 128) * 128                   # unmasked one-hot / MXU K dim

    # Fold embedding + input projection + both biases into one lookup table,
    # permute gate columns to (i, f, o, g), zero-pad the note axis to 128.
    proj = _reorder_gates(emb @ w_ih.T + bias[None, :])             # (NN, 4H)
    proj_pad = jnp.zeros((NN_pad, 4 * H), jnp.float32).at[:NN].set(proj)

    w_hh_t = _reorder_gates(jnp.transpose(w_hh))                    # (H, 4H)

    w_fc_pad = jnp.zeros((H, C_pad), jnp.float32).at[:, :C].set(w_fc.T)
    b_fc_pad = jnp.zeros((1, C_pad), jnp.float32).at[:, :C].set(b_fc)

    return dict(
        proj_table=proj_pad.astype(MXU_DTYPE),        # (NN_pad, 4H)
        w_hh_t=w_hh_t.astype(MXU_DTYPE),              # (H, 4H)
        w_fc_pad=w_fc_pad.astype(MXU_DTYPE),          # (H, C_pad)
        b_fc_pad=b_fc_pad,                            # (1, C_pad) f32
        hidden_dim=H, num_chords=C, c_pad=C_pad, nn_pad=NN_pad)


def _choose_batch_chunk(B):
    """Per-grid-step batch chunk: big enough to amortize the serial recurrence,
    but keep >= 2 chunks when B allows so both v7x TensorCores get work."""
    b8 = ((B + 7) // 8) * 8
    if b8 <= 16:
        return b8
    half = (b8 + 1) // 2
    bc = ((half + 15) // 16) * 16                     # multiple of 16 (bf16 packing)
    return min(bc, MAX_B_CHUNK)


def harmonizer_forward(x_ids, prep):
    """x_ids: int32 [B, T] note indices -> float32 [B, T, num_chords]."""
    B, T = x_ids.shape
    H = prep["hidden_dim"]
    C = prep["num_chords"]
    C_pad = prep["c_pad"]
    NN_pad = prep["nn_pad"]

    Bc = _choose_batch_chunk(B)
    n_chunks = pl.cdiv(B, Bc)
    B_pad = n_chunks * Bc

    # bf16 xp scratch only when 16-row packed tiles stay aligned per step.
    xp_dtype = MXU_DTYPE if Bc % 16 == 0 else jnp.float32

    # Pad batch, then flatten chunk-major / time-major:
    # flat row = ((chunk * T) + t) * Bc + b_in_chunk (padded rows discarded).
    ids = jnp.zeros((B_pad, T), jnp.int32).at[:B].set(x_ids.astype(jnp.int32))
    ids_flat = (ids.reshape(n_chunks, Bc, T)
                   .transpose(0, 2, 1)                       # (chunk, T, Bc)
                   .reshape(n_chunks * T * Bc, 1))

    kernel = functools.partial(harmonizer_kernel, T=T, Bc=Bc, H=H, NN_pad=NN_pad)

    out_flat = pl.pallas_call(
        kernel,
        out_shape=jax.ShapeDtypeStruct((n_chunks * T * Bc, C_pad), jnp.float32),
        grid_spec=pltpu.PrefetchScalarGridSpec(
            num_scalar_prefetch=0,
            grid=(n_chunks,),
            in_specs=[
                pl.BlockSpec((T * Bc, 1), lambda i: (i, 0)),     # ids for this chunk
                pl.BlockSpec((NN_pad, 4 * H), lambda i: (0, 0)),  # folded proj table
                pl.BlockSpec((H, 4 * H), lambda i: (0, 0)),       # W_hh^T (gate-permuted)
                pl.BlockSpec((H, C_pad), lambda i: (0, 0)),       # W_fc (padded)
                pl.BlockSpec((1, C_pad), lambda i: (0, 0)),       # b_fc (padded)
            ],
            out_specs=pl.BlockSpec((T * Bc, C_pad), lambda i: (i, 0)),
            scratch_shapes=[
                pltpu.VMEM((T * Bc, 4 * H), xp_dtype),            # input projections
            ]),
        compiler_params=pltpu.CompilerParams(
            # batch chunks are independent -> shard across TensorCores (v7x megacore)
            dimension_semantics=("parallel",),
            vmem_limit_bytes=32 * 1024 * 1024),
    )(ids_flat, prep["proj_table"], prep["w_hh_t"], prep["w_fc_pad"],
      prep["b_fc_pad"])

    # (chunk, T, Bc, C_pad) -> (B, T, C)
    out = (out_flat.reshape(n_chunks, T, Bc, C_pad)
                   .transpose(0, 2, 1, 3)
                   .reshape(B_pad, T, C_pad))
    return out[:B, :, :C]


def init_params(key, num_notes, num_chords, embedding_dim=64, hidden_dim=128):
    ks = jax.random.split(key, 7)
    s = 1.0 / jnp.sqrt(hidden_dim)
    return dict(
        embed=jax.random.normal(ks[0], (num_notes, embedding_dim), jnp.float32),
        w_ih=jax.random.uniform(ks[1], (4 * hidden_dim, embedding_dim),
                                jnp.float32, -s, s),
        w_hh=jax.random.uniform(ks[2], (4 * hidden_dim, hidden_dim),
                                jnp.float32, -s, s),
        b_ih=jax.random.uniform(ks[3], (4 * hidden_dim,), jnp.float32, -s, s),
        b_hh=jax.random.uniform(ks[4], (4 * hidden_dim,), jnp.float32, -s, s),
        w_fc=jax.random.uniform(ks[5], (num_chords, hidden_dim),
                                jnp.float32, -s, s),
        b_fc=jax.random.uniform(ks[6], (num_chords,), jnp.float32, -s, s),
    )


def harmonizer_reference(x_ids, params):
    """Pure-JAX f32 reference replicating nn.Embedding + nn.LSTM + nn.Linear."""
    emb = params["embed"][x_ids]             # (B, T, E)
    B, T, _ = emb.shape
    H = params["w_hh"].shape[1]
    w_ih, w_hh = params["w_ih"], params["w_hh"]
    bias = params["b_ih"] + params["b_hh"]

    def cell(carry, xt):
        h, c = carry
        gates = xt @ w_ih.T + h @ w_hh.T + bias
        i, f, g, o = jnp.split(gates, 4, axis=-1)
        i, f, o = jax.nn.sigmoid(i), jax.nn.sigmoid(f), jax.nn.sigmoid(o)
        g = jnp.tanh(g)
        c = f * c + i * g
        h = o * jnp.tanh(c)
        return (h, c), h

    x_tm = emb.transpose(1, 0, 2)             # (T, B, E)
    _, hs = lax.scan(cell, (jnp.zeros((B, H)), jnp.zeros((B, H))), x_tm)
    out = hs.transpose(1, 0, 2) @ params["w_fc"].T + params["b_fc"]
    return out


if __name__ == "__main__":
    NUM_NOTES = 16
    NUM_CHORDS = 8
    EMBED_DIM = 64
    HIDDEN_DIM = 128
    B, T = 2, 8

    key = jax.random.PRNGKey(0)
    k_x, k_p = jax.random.split(key)
    x = jax.random.randint(k_x, (B, T), 0, NUM_NOTES, dtype=jnp.int32)
    params = init_params(k_p, NUM_NOTES, NUM_CHORDS, EMBED_DIM, HIDDEN_DIM)

    prep = prepare_params(params)             # one-time prep, hoisted out of forward
    out = harmonizer_forward(x, prep)
    out = jax.block_until_ready(out)

    ref = harmonizer_reference(x, params)
    assert out.shape == (B, T, NUM_CHORDS), out.shape

    # bf16 MXU operands (f32 accumulation) -> loosened tolerance vs exact-f32 ref.
    tol = 5e-2 if MXU_DTYPE == jnp.bfloat16 else 1e-4
    assert jnp.allclose(out, ref, atol=tol, rtol=tol), \
        f"max abs diff {jnp.max(jnp.abs(out - ref))}"

    print("KERNEL_OK")
</pallas_src>

<mosaic_0001>
module attributes {stable_mosaic.version = 11 : i64} {
  func.func @harmonizer_kernel(%arg0: i32, %arg1: memref<64x1xi32, #tpu.memory_space<vmem>>, %arg2: memref<128x512xbf16, #tpu.memory_space<vmem>>, %arg3: memref<128x512xbf16, #tpu.memory_space<vmem>>, %arg4: memref<128x128xbf16, #tpu.memory_space<vmem>>, %arg5: memref<1x128xf32, #tpu.memory_space<vmem>>, %arg6: memref<64x128xf32, #tpu.memory_space<vmem>>, %arg7: memref<64x512xf32, #tpu.memory_space<vmem>>) attributes {dimension_semantics = [#tpu.dimension_semantics<parallel>], iteration_bounds = array<i64: 1>, scalar_prefetch = 0 : i64, scratch_operands = 1 : i64, tpu.core_type = #tpu.core_type<tc>, window_params = [{transform_indices = @transform_0, window_bounds = array<i64: 64, 1>}, {pipeline_mode = #tpu.pipeline_mode<synchronous>, transform_indices = @transform_1, window_bounds = array<i64: 128, 512>}, {pipeline_mode = #tpu.pipeline_mode<synchronous>, transform_indices = @transform_2, window_bounds = array<i64: 128, 512>}, {pipeline_mode = #tpu.pipeline_mode<synchronous>, transform_indices = @transform_3, window_bounds = array<i64: 128, 128>}, {pipeline_mode = #tpu.pipeline_mode<synchronous>, transform_indices = @transform_4, window_bounds = array<i64: 1, 128>}, {transform_indices = @transform_5, window_bounds = array<i64: 64, 128>}]} {
    %c0 = arith.constant 0 : index
    %c0_0 = arith.constant 0 : index
    %0 = vector.load %arg1[%c0, %c0_0] : memref<64x1xi32, #tpu.memory_space<vmem>>, vector<64x1xi32>
    %1 = tpu.iota {dimensions = array<i32: 1>} : vector<64x128xi32>
    %2 = vector.broadcast %0 : vector<64x1xi32> to vector<64x128xi32>
    %3 = arith.cmpi eq, %1, %2 : vector<64x128xi32>
    %4 = arith.extui %3 : vector<64x128xi1> to vector<64x128xi32>
    %5 = arith.sitofp %4 : vector<64x128xi32> to vector<64x128xf32>
    %6 = arith.truncf %5 : vector<64x128xf32> to vector<64x128xbf16>
    %c0_1 = arith.constant 0 : index
    %c0_2 = arith.constant 0 : index
    %7 = vector.load %arg2[%c0_1, %c0_2] : memref<128x512xbf16, #tpu.memory_space<vmem>>, vector<128x512xbf16>
    %cst = arith.constant dense<0.000000e+00> : vector<64x512xf32>
    %8 = tpu.matmul %6, %7, %cst {dimension_numbers = #tpu.dot_dimension_numbers<[1], [0], [0], [1], [0, 0, 1, 1], [], []>} : vector<64x128xbf16>, vector<128x512xbf16>, vector<64x512xf32> -> vector<64x512xf32>
    %c0_3 = arith.constant 0 : index
    %c0_4 = arith.constant 0 : index
    %9 = vector.load %arg7[%c0_3, %c0_4] : memref<64x512xf32, #tpu.memory_space<vmem>>, vector<64x512xf32>
    tpu.vector_store %arg7[%c0_3, %c0_4], %8 {strides = array<i32>} : memref<64x512xf32, #tpu.memory_space<vmem>>, vector<64x512xf32>,
    %c0_5 = arith.constant 0 : index
    %c0_6 = arith.constant 0 : index
    %10 = vector.load %arg3[%c0_5, %c0_6] : memref<128x512xbf16, #tpu.memory_space<vmem>>, vector<128x512xbf16>
    %c0_7 = arith.constant 0 : index
    %c0_8 = arith.constant 0 : index
    %11 = vector.load %arg4[%c0_7, %c0_8] : memref<128x128xbf16, #tpu.memory_space<vmem>>, vector<128x128xbf16>
    %c0_9 = arith.constant 0 : index
    %c0_10 = arith.constant 0 : index
    %12 = vector.load %arg5[%c0_9, %c0_10] : memref<1x128xf32, #tpu.memory_space<vmem>>, vector<1x128xf32>
    %cst_11 = arith.constant 0.000000e+00 : bf16
    %13 = vector.broadcast %cst_11 : bf16 to vector<8x128xbf16>
    %cst_12 = arith.constant 0.000000e+00 : f32
    %14 = vector.broadcast %cst_12 : f32 to vector<8x128xf32>
    %c0_13 = arith.constant 0 : index
    %c0_14 = arith.constant 0 : index
    %15 = vector.load %arg7[%c0_13, %c0_14] : memref<64x512xf32, #tpu.memory_space<vmem>>, vector<8x512xf32>
    %cst_15 = arith.constant dense<0.000000e+00> : vector<8x512xf32>
    %16 = tpu.matmul %13, %10, %cst_15 {dimension_numbers = #tpu.dot_dimension_numbers<[1], [0], [0], [1], [0, 0, 1, 1], [], []>} : vector<8x128xbf16>, vector<128x512xbf16>, vector<8x512xf32> -> vector<8x512xf32>
    %17 = arith.addf %15, %16 : vector<8x512xf32>
    %18 = vector.extract_strided_slice %17 {offsets = [0, 0], sizes = [8, 384], strides = [1, 1]} : vector<8x512xf32> to vector<8x384xf32>
    %19 = arith.negf %18 : vector<8x384xf32>
    %20 = math.exp %19 : vector<8x384xf32>
    %cst_16 = arith.constant 1.000000e+00 : f32
    %21 = vector.broadcast %cst_16 : f32 to vector<8x384xf32>
    %22 = arith.addf %21, %20 : vector<8x384xf32>
    %23 = arith.divf %21, %22 : vector<8x384xf32>
    %24 = vector.extract_strided_slice %23 {offsets = [0, 0], sizes = [8, 128], strides = [1, 1]} : vector<8x384xf32> to vector<8x128xf32>
    %25 = vector.extract_strided_slice %23 {offsets = [0, 128], sizes = [8, 128], strides = [1, 1]} : vector<8x384xf32> to vector<8x128xf32>
    %26 = vector.extract_strided_slice %23 {offsets = [0, 256], sizes = [8, 128], strides = [1, 1]} : vector<8x384xf32> to vector<8x128xf32>
    %27 = vector.extract_strided_slice %17 {offsets = [0, 384], sizes = [8, 128], strides = [1, 1]} : vector<8x512xf32> to vector<8x128xf32>
    %28 = math.tanh %27 : vector<8x128xf32>
    %29 = arith.mulf %25, %14 : vector<8x128xf32>
    %30 = arith.mulf %24, %28 : vector<8x128xf32>
    %31 = arith.addf %29, %30 : vector<8x128xf32>
    %32 = math.tanh %31 : vector<8x128xf32>
    %33 = arith.mulf %26, %32 : vector<8x128xf32>
    %34 = arith.truncf %33 : vector<8x128xf32> to vector<8x128xbf16>
    %cst_17 = arith.constant dense<0.000000e+00> : vector<8x128xf32>
    %35 = tpu.matmul %34, %11, %cst_17 {dimension_numbers = #tpu.dot_dimension_numbers<[1], [0], [0], [1], [0, 0, 1, 1], [], []>} : vector<8x128xbf16>, vector<128x128xbf16>, vector<8x128xf32> -> vector<8x128xf32>
    %36 = vector.broadcast %12 : vector<1x128xf32> to vector<8x128xf32>
    %37 = arith.addf %35, %36 : vector<8x128xf32>
    %c0_18 = arith.constant 0 : index
    %c0_19 = arith.constant 0 : index
    %38 = vector.load %arg6[%c0_18, %c0_19] : memref<64x128xf32, #tpu.memory_space<vmem>>, vector<8x128xf32>
    tpu.vector_store %arg6[%c0_18, %c0_19], %37 {strides = array<i32>} : memref<64x128xf32, #tpu.memory_space<vmem>>, vector<8x128xf32>,
    %c8 = arith.constant 8 : index
    %c0_20 = arith.constant 0 : index
    %39 = vector.load %arg7[%c8, %c0_20] : memref<64x512xf32, #tpu.memory_space<vmem>>, vector<8x512xf32>
    %cst_21 = arith.constant dense<0.000000e+00> : vector<8x512xf32>
    %40 = tpu.matmul %34, %10, %cst_21 {dimension_numbers = #tpu.dot_dimension_numbers<[1], [0], [0], [1], [0, 0, 1, 1], [], []>} : vector<8x128xbf16>, vector<128x512xbf16>, vector<8x512xf32> -> vector<8x512xf32>
    %41 = arith.addf %39, %40 : vector<8x512xf32>
    %42 = vector.extract_strided_slice %41 {offsets = [0, 0], sizes = [8, 384], strides = [1, 1]} : vector<8x512xf32> to vector<8x384xf32>
    %43 = arith.negf %42 : vector<8x384xf32>
    %44 = math.exp %43 : vector<8x384xf32>
    %cst_22 = arith.constant 1.000000e+00 : f32
    %45 = vector.broadcast %cst_22 : f32 to vector<8x384xf32>
    %46 = arith.addf %45, %44 : vector<8x384xf32>
    %47 = arith.divf %45, %46 : vector<8x384xf32>
    %48 = vector.extract_strided_slice %47 {offsets = [0, 0], sizes = [8, 128], strides = [1, 1]} : vector<8x384xf32> to vector<8x128xf32>
    %49 = vector.extract_strided_slice %47 {offsets = [0, 128], sizes = [8, 128], strides = [1, 1]} : vector<8x384xf32> to vector<8x128xf32>
    %50 = vector.extract_strided_slice %47 {offsets = [0, 256], sizes = [8, 128], strides = [1, 1]} : vector<8x384xf32> to vector<8x128xf32>
    %51 = vector.extract_strided_slice %41 {offsets = [0, 384], sizes = [8, 128], strides = [1, 1]} : vector<8x512xf32> to vector<8x128xf32>
    %52 = math.tanh %51 : vector<8x128xf32>
    %53 = arith.mulf %49, %31 : vector<8x128xf32>
    %54 = arith.mulf %48, %52 : vector<8x128xf32>
    %55 = arith.addf %53, %54 : vector<8x128xf32>
    %56 = math.tanh %55 : vector<8x128xf32>
    %57 = arith.mulf %50, %56 : vector<8x128xf32>
    %58 = arith.truncf %57 : vector<8x128xf32> to vector<8x128xbf16>
    %cst_23 = arith.constant dense<0.000000e+00> : vector<8x128xf32>
    %59 = tpu.matmul %58, %11, %cst_23 {dimension_numbers = #tpu.dot_dimension_numbers<[1], [0], [0], [1], [0, 0, 1, 1], [], []>} : vector<8x128xbf16>, vector<128x128xbf16>, vector<8x128xf32> -> vector<8x128xf32>
    %60 = vector.broadcast %12 : vector<1x128xf32> to vector<8x128xf32>
    %61 = arith.addf %59, %60 : vector<8x128xf32>
    %c8_24 = arith.constant 8 : index
    %c0_25 = arith.constant 0 : index
    %62 = vector.load %arg6[%c8_24, %c0_25] : memref<64x128xf32, #tpu.memory_space<vmem>>, vector<8x128xf32>
    tpu.vector_store %arg6[%c8_24, %c0_25], %61 {strides = array<i32>} : memref<64x128xf32, #tpu.memory_space<vmem>>, vector<8x128xf32>,
    %c16 = arith.constant 16 : index
    %c0_26 = arith.constant 0 : index
    %63 = vector.load %arg7[%c16, %c0_26] : memref<64x512xf32, #tpu.memory_space<vmem>>, vector<8x512xf32>
    %cst_27 = arith.constant dense<0.000000e+00> : vector<8x512xf32>
    %64 = tpu.matmul %58, %10, %cst_27 {dimension_numbers = #tpu.dot_dimension_numbers<[1], [0], [0], [1], [0, 0, 1, 1], [], []>} : vector<8x128xbf16>, vector<128x512xbf16>, vector<8x512xf32> -> vector<8x512xf32>
    %65 = arith.addf %63, %64 : vector<8x512xf32>
    %66 = vector.extract_strided_slice %65 {offsets = [0, 0], sizes = [8, 384], strides = [1, 1]} : vector<8x512xf32> to vector<8x384xf32>
    %67 = arith.negf %66 : vector<8x384xf32>
    %68 = math.exp %67 : vector<8x384xf32>
    %cst_28 = arith.constant 1.000000e+00 : f32
    %69 = vector.broadcast %cst_28 : f32 to vector<8x384xf32>
    %70 = arith.addf %69, %68 : vector<8x384xf32>
    %71 = arith.divf %69, %70 : vector<8x384xf32>
    %72 = vector.extract_strided_slice %71 {offsets = [0, 0], sizes = [8, 128], strides = [1, 1]} : vector<8x384xf32> to vector<8x128xf32>
    %73 = vector.extract_strided_slice %71 {offsets = [0, 128], sizes = [8, 128], strides = [1, 1]} : vector<8x384xf32> to vector<8x128xf32>
    %74 = vector.extract_strided_slice %71 {offsets = [0, 256], sizes = [8, 128], strides = [1, 1]} : vector<8x384xf32> to vector<8x128xf32>
    %75 = vector.extract_strided_slice %65 {offsets = [0, 384], sizes = [8, 128], strides = [1, 1]} : vector<8x512xf32> to vector<8x128xf32>
    %76 = math.tanh %75 : vector<8x128xf32>
    %77 = arith.mulf %73, %55 : vector<8x128xf32>
    %78 = arith.mulf %72, %76 : vector<8x128xf32>
    %79 = arith.addf %77, %78 : vector<8x128xf32>
    %80 = math.tanh %79 : vector<8x128xf32>
    %81 = arith.mulf %74, %80 : vector<8x128xf32>
    %82 = arith.truncf %81 : vector<8x128xf32> to vector<8x128xbf16>
    %cst_29 = arith.constant dense<0.000000e+00> : vector<8x128xf32>
    %83 = tpu.matmul %82, %11, %cst_29 {dimension_numbers = #tpu.dot_dimension_numbers<[1], [0], [0], [1], [0, 0, 1, 1], [], []>} : vector<8x128xbf16>, vector<128x128xbf16>, vector<8x128xf32> -> vector<8x128xf32>
    %84 = vector.broadcast %12 : vector<1x128xf32> to vector<8x128xf32>
    %85 = arith.addf %83, %84 : vector<8x128xf32>
    %c16_30 = arith.constant 16 : index
    %c0_31 = arith.constant 0 : index
    %86 = vector.load %arg6[%c16_30, %c0_31] : memref<64x128xf32, #tpu.memory_space<vmem>>, vector<8x128xf32>
    tpu.vector_store %arg6[%c16_30, %c0_31], %85 {strides = array<i32>} : memref<64x128xf32, #tpu.memory_space<vmem>>, vector<8x128xf32>,
    %c24 = arith.constant 24 : index
    %c0_32 = arith.constant 0 : index
    %87 = vector.load %arg7[%c24, %c0_32] : memref<64x512xf32, #tpu.memory_space<vmem>>, vector<8x512xf32>
    %cst_33 = arith.constant dense<0.000000e+00> : vector<8x512xf32>
    %88 = tpu.matmul %82, %10, %cst_33 {dimension_numbers = #tpu.dot_dimension_numbers<[1], [0], [0], [1], [0, 0, 1, 1], [], []>} : vector<8x128xbf16>, vector<128x512xbf16>, vector<8x512xf32> -> vector<8x512xf32>
    %89 = arith.addf %87, %88 : vector<8x512xf32>
    %90 = vector.extract_strided_slice %89 {offsets = [0, 0], sizes = [8, 384], strides = [1, 1]} : vector<8x512xf32> to vector<8x384xf32>
    %91 = arith.negf %90 : vector<8x384xf32>
    %92 = math.exp %91 : vector<8x384xf32>
    %cst_34 = arith.constant 1.000000e+00 : f32
    %93 = vector.broadcast %cst_34 : f32 to vector<8x384xf32>
    %94 = arith.addf %93, %92 : vector<8x384xf32>
    %95 = arith.divf %93, %94 : vector<8x384xf32>
    %96 = vector.extract_strided_slice %95 {offsets = [0, 0], sizes = [8, 128], strides = [1, 1]} : vector<8x384xf32> to vector<8x128xf32>
    %97 = vector.extract_strided_slice %95 {offsets = [0, 128], sizes = [8, 128], strides = [1, 1]} : vector<8x384xf32> to vector<8x128xf32>
    %98 = vector.extract_strided_slice %95 {offsets = [0, 256], sizes = [8, 128], strides = [1, 1]} : vector<8x384xf32> to vector<8x128xf32>
    %99 = vector.extract_strided_slice %89 {offsets = [0, 384], sizes = [8, 128], strides = [1, 1]} : vector<8x512xf32> to vector<8x128xf32>
    %100 = math.tanh %99 : vector<8x128xf32>
    %101 = arith.mulf %97, %79 : vector<8x128xf32>
    %102 = arith.mulf %96, %100 : vector<8x128xf32>
    %103 = arith.addf %101, %102 : vector<8x128xf32>
    %104 = math.tanh %103 : vector<8x128xf32>
    %105 = arith.mulf %98, %104 : vector<8x128xf32>
    %106 = arith.truncf %105 : vector<8x128xf32> to vector<8x128xbf16>
    %cst_35 = arith.constant dense<0.000000e+00> : vector<8x128xf32>
    %107 = tpu.matmul %106, %11, %cst_35 {dimension_numbers = #tpu.dot_dimension_numbers<[1], [0], [0], [1], [0, 0, 1, 1], [], []>} : vector<8x128xbf16>, vector<128x128xbf16>, vector<8x128xf32> -> vector<8x128xf32>
    %108 = vector.broadcast %12 : vector<1x128xf32> to vector<8x128xf32>
    %109 = arith.addf %107, %108 : vector<8x128xf32>
    %c24_36 = arith.constant 24 : index
    %c0_37 = arith.constant 0 : index
    %110 = vector.load %arg6[%c24_36, %c0_37] : memref<64x128xf32, #tpu.memory_space<vmem>>, vector<8x128xf32>
    tpu.vector_store %arg6[%c24_36, %c0_37], %109 {strides = array<i32>} : memref<64x128xf32, #tpu.memory_space<vmem>>, vector<8x128xf32>,
    %c32 = arith.constant 32 : index
    %c0_38 = arith.constant 0 : index
    %111 = vector.load %arg7[%c32, %c0_38] : memref<64x512xf32, #tpu.memory_space<vmem>>, vector<8x512xf32>
    %cst_39 = arith.constant dense<0.000000e+00> : vector<8x512xf32>
    %112 = tpu.matmul %106, %10, %cst_39 {dimension_numbers = #tpu.dot_dimension_numbers<[1], [0], [0], [1], [0, 0, 1, 1], [], []>} : vector<8x128xbf16>, vector<128x512xbf16>, vector<8x512xf32> -> vector<8x512xf32>
    %113 = arith.addf %111, %112 : vector<8x512xf32>
    %114 = vector.extract_strided_slice %113 {offsets = [0, 0], sizes = [8, 384], strides = [1, 1]} : vector<8x512xf32> to vector<8x384xf32>
    %115 = arith.negf %114 : vector<8x384xf32>
    %116 = math.exp %115 : vector<8x384xf32>
    %cst_40 = arith.constant 1.000000e+00 : f32
    %117 = vector.broadcast %cst_40 : f32 to vector<8x384xf32>
    %118 = arith.addf %117, %116 : vector<8x384xf32>
    %119 = arith.divf %117, %118 : vector<8x384xf32>
    %120 = vector.extract_strided_slice %119 {offsets = [0, 0], sizes = [8, 128], strides = [1, 1]} : vector<8x384xf32> to vector<8x128xf32>
    %121 = vector.extract_strided_slice %119 {offsets = [0, 128], sizes = [8, 128], strides = [1, 1]} : vector<8x384xf32> to vector<8x128xf32>
    %122 = vector.extract_strided_slice %119 {offsets = [0, 256], sizes = [8, 128], strides = [1, 1]} : vector<8x384xf32> to vector<8x128xf32>
    %123 = vector.extract_strided_slice %113 {offsets = [0, 384], sizes = [8, 128], strides = [1, 1]} : vector<8x512xf32> to vector<8x128xf32>
    %124 = math.tanh %123 : vector<8x128xf32>
    %125 = arith.mulf %121, %103 : vector<8x128xf32>
    %126 = arith.mulf %120, %124 : vector<8x128xf32>
    %127 = arith.addf %125, %126 : vector<8x128xf32>
    %128 = math.tanh %127 : vector<8x128xf32>
    %129 = arith.mulf %122, %128 : vector<8x128xf32>
    %130 = arith.truncf %129 : vector<8x128xf32> to vector<8x128xbf16>
    %cst_41 = arith.constant dense<0.000000e+00> : vector<8x128xf32>
    %131 = tpu.matmul %130, %11, %cst_41 {dimension_numbers = #tpu.dot_dimension_numbers<[1], [0], [0], [1], [0, 0, 1, 1], [], []>} : vector<8x128xbf16>, vector<128x128xbf16>, vector<8x128xf32> -> vector<8x128xf32>
    %132 = vector.broadcast %12 : vector<1x128xf32> to vector<8x128xf32>
    %133 = arith.addf %131, %132 : vector<8x128xf32>
    %c32_42 = arith.constant 32 : index
    %c0_43 = arith.constant 0 : index
    %134 = vector.load %arg6[%c32_42, %c0_43] : memref<64x128xf32, #tpu.memory_space<vmem>>, vector<8x128xf32>
    tpu.vector_store %arg6[%c32_42, %c0_43], %133 {strides = array<i32>} : memref<64x128xf32, #tpu.memory_space<vmem>>, vector<8x128xf32>,
    %c40 = arith.constant 40 : index
    %c0_44 = arith.constant 0 : index
    %135 = vector.load %arg7[%c40, %c0_44] : memref<64x512xf32, #tpu.memory_space<vmem>>, vector<8x512xf32>
    %cst_45 = arith.constant dense<0.000000e+00> : vector<8x512xf32>
    %136 = tpu.matmul %130, %10, %cst_45 {dimension_numbers = #tpu.dot_dimension_numbers<[1], [0], [0], [1], [0, 0, 1, 1], [], []>} : vector<8x128xbf16>, vector<128x512xbf16>, vector<8x512xf32> -> vector<8x512xf32>
    %137 = arith.addf %135, %136 : vector<8x512xf32>
    %138 = vector.extract_strided_slice %137 {offsets = [0, 0], sizes = [8, 384], strides = [1, 1]} : vector<8x512xf32> to vector<8x384xf32>
    %139 = arith.negf %138 : vector<8x384xf32>
    %140 = math.exp %139 : vector<8x384xf32>
    %cst_46 = arith.constant 1.000000e+00 : f32
    %141 = vector.broadcast %cst_46 : f32 to vector<8x384xf32>
    %142 = arith.addf %141, %140 : vector<8x384xf32>
    %143 = arith.divf %141, %142 : vector<8x384xf32>
    %144 = vector.extract_strided_slice %143 {offsets = [0, 0], sizes = [8, 128], strides = [1, 1]} : vector<8x384xf32> to vector<8x128xf32>
    %145 = vector.extract_strided_slice %143 {offsets = [0, 128], sizes = [8, 128], strides = [1, 1]} : vector<8x384xf32> to vector<8x128xf32>
    %146 = vector.extract_strided_slice %143 {offsets = [0, 256], sizes = [8, 128], strides = [1, 1]} : vector<8x384xf32> to vector<8x128xf32>
    %147 = vector.extract_strided_slice %137 {offsets = [0, 384], sizes = [8, 128], strides = [1, 1]} : vector<8x512xf32> to vector<8x128xf32>
    %148 = math.tanh %147 : vector<8x128xf32>
    %149 = arith.mulf %145, %127 : vector<8x128xf32>
    %150 = arith.mulf %144, %148 : vector<8x128xf32>
    %151 = arith.addf %149, %150 : vector<8x128xf32>
    %152 = math.tanh %151 : vector<8x128xf32>
    %153 = arith.mulf %146, %152 : vector<8x128xf32>
    %154 = arith.truncf %153 : vector<8x128xf32> to vector<8x128xbf16>
    %cst_47 = arith.constant dense<0.000000e+00> : vector<8x128xf32>
    %155 = tpu.matmul %154, %11, %cst_47 {dimension_numbers = #tpu.dot_dimension_numbers<[1], [0], [0], [1], [0, 0, 1, 1], [], []>} : vector<8x128xbf16>, vector<128x128xbf16>, vector<8x128xf32> -> vector<8x128xf32>
    %156 = vector.broadcast %12 : vector<1x128xf32> to vector<8x128xf32>
    %157 = arith.addf %155, %156 : vector<8x128xf32>
    %c40_48 = arith.constant 40 : index
    %c0_49 = arith.constant 0 : index
    %158 = vector.load %arg6[%c40_48, %c0_49] : memref<64x128xf32, #tpu.memory_space<vmem>>, vector<8x128xf32>
    tpu.vector_store %arg6[%c40_48, %c0_49], %157 {strides = array<i32>} : memref<64x128xf32, #tpu.memory_space<vmem>>, vector<8x128xf32>,
    %c48 = arith.constant 48 : index
    %c0_50 = arith.constant 0 : index
    %159 = vector.load %arg7[%c48, %c0_50] : memref<64x512xf32, #tpu.memory_space<vmem>>, vector<8x512xf32>
    %cst_51 = arith.constant dense<0.000000e+00> : vector<8x512xf32>
    %160 = tpu.matmul %154, %10, %cst_51 {dimension_numbers = #tpu.dot_dimension_numbers<[1], [0], [0], [1], [0, 0, 1, 1], [], []>} : vector<8x128xbf16>, vector<128x512xbf16>, vector<8x512xf32> -> vector<8x512xf32>
    %161 = arith.addf %159, %160 : vector<8x512xf32>
    %162 = vector.extract_strided_slice %161 {offsets = [0, 0], sizes = [8, 384], strides = [1, 1]} : vector<8x512xf32> to vector<8x384xf32>
    %163 = arith.negf %162 : vector<8x384xf32>
    %164 = math.exp %163 : vector<8x384xf32>
    %cst_52 = arith.constant 1.000000e+00 : f32
    %165 = vector.broadcast %cst_52 : f32 to vector<8x384xf32>
    %166 = arith.addf %165, %164 : vector<8x384xf32>
    %167 = arith.divf %165, %166 : vector<8x384xf32>
    %168 = vector.extract_strided_slice %167 {offsets = [0, 0], sizes = [8, 128], strides = [1, 1]} : vector<8x384xf32> to vector<8x128xf32>
    %169 = vector.extract_strided_slice %167 {offsets = [0, 128], sizes = [8, 128], strides = [1, 1]} : vector<8x384xf32> to vector<8x128xf32>
    %170 = vector.extract_strided_slice %167 {offsets = [0, 256], sizes = [8, 128], strides = [1, 1]} : vector<8x384xf32> to vector<8x128xf32>
    %171 = vector.extract_strided_slice %161 {offsets = [0, 384], sizes = [8, 128], strides = [1, 1]} : vector<8x512xf32> to vector<8x128xf32>
    %172 = math.tanh %171 : vector<8x128xf32>
    %173 = arith.mulf %169, %151 : vector<8x128xf32>
    %174 = arith.mulf %168, %172 : vector<8x128xf32>
    %175 = arith.addf %173, %174 : vector<8x128xf32>
    %176 = math.tanh %175 : vector<8x128xf32>
    %177 = arith.mulf %170, %176 : vector<8x128xf32>
    %178 = arith.truncf %177 : vector<8x128xf32> to vector<8x128xbf16>
    %cst_53 = arith.constant dense<0.000000e+00> : vector<8x128xf32>
    %179 = tpu.matmul %178, %11, %cst_53 {dimension_numbers = #tpu.dot_dimension_numbers<[1], [0], [0], [1], [0, 0, 1, 1], [], []>} : vector<8x128xbf16>, vector<128x128xbf16>, vector<8x128xf32> -> vector<8x128xf32>
    %180 = vector.broadcast %12 : vector<1x128xf32> to vector<8x128xf32>
    %181 = arith.addf %179, %180 : vector<8x128xf32>
    %c48_54 = arith.constant 48 : index
    %c0_55 = arith.constant 0 : index
    %182 = vector.load %arg6[%c48_54, %c0_55] : memref<64x128xf32, #tpu.memory_space<vmem>>, vector<8x128xf32>
    tpu.vector_store %arg6[%c48_54, %c0_55], %181 {strides = array<i32>} : memref<64x128xf32, #tpu.memory_space<vmem>>, vector<8x128xf32>,
    %c56 = arith.constant 56 : index
    %c0_56 = arith.constant 0 : index
    %183 = vector.load %arg7[%c56, %c0_56] : memref<64x512xf32, #tpu.memory_space<vmem>>, vector<8x512xf32>
    %cst_57 = arith.constant dense<0.000000e+00> : vector<8x512xf32>
    %184 = tpu.matmul %178, %10, %cst_57 {dimension_numbers = #tpu.dot_dimension_numbers<[1], [0], [0], [1], [0, 0, 1, 1], [], []>} : vector<8x128xbf16>, vector<128x512xbf16>, vector<8x512xf32> -> vector<8x512xf32>
    %185 = arith.addf %183, %184 : vector<8x512xf32>
    %186 = vector.extract_strided_slice %185 {offsets = [0, 0], sizes = [8, 384], strides = [1, 1]} : vector<8x512xf32> to vector<8x384xf32>
    %187 = arith.negf %186 : vector<8x384xf32>
    %188 = math.exp %187 : vector<8x384xf32>
    %cst_58 = arith.constant 1.000000e+00 : f32
    %189 = vector.broadcast %cst_58 : f32 to vector<8x384xf32>
    %190 = arith.addf %189, %188 : vector<8x384xf32>
    %191 = arith.divf %189, %190 : vector<8x384xf32>
    %192 = vector.extract_strided_slice %191 {offsets = [0, 0], sizes = [8, 128], strides = [1, 1]} : vector<8x384xf32> to vector<8x128xf32>
    %193 = vector.extract_strided_slice %191 {offsets = [0, 128], sizes = [8, 128], strides = [1, 1]} : vector<8x384xf32> to vector<8x128xf32>
    %194 = vector.extract_strided_slice %191 {offsets = [0, 256], sizes = [8, 128], strides = [1, 1]} : vector<8x384xf32> to vector<8x128xf32>
    %195 = vector.extract_strided_slice %185 {offsets = [0, 384], sizes = [8, 128], strides = [1, 1]} : vector<8x512xf32> to vector<8x128xf32>
    %196 = math.tanh %195 : vector<8x128xf32>
    %197 = arith.mulf %193, %175 : vector<8x128xf32>
    %198 = arith.mulf %192, %196 : vector<8x128xf32>
    %199 = arith.addf %197, %198 : vector<8x128xf32>
    %200 = math.tanh %199 : vector<8x128xf32>
    %201 = arith.mulf %194, %200 : vector<8x128xf32>
    %202 = arith.truncf %201 : vector<8x128xf32> to vector<8x128xbf16>
    %cst_59 = arith.constant dense<0.000000e+00> : vector<8x128xf32>
    %203 = tpu.matmul %202, %11, %cst_59 {dimension_numbers = #tpu.dot_dimension_numbers<[1], [0], [0], [1], [0, 0, 1, 1], [], []>} : vector<8x128xbf16>, vector<128x128xbf16>, vector<8x128xf32> -> vector<8x128xf32>
    %204 = vector.broadcast %12 : vector<1x128xf32> to vector<8x128xf32>
    %205 = arith.addf %203, %204 : vector<8x128xf32>
    %c56_60 = arith.constant 56 : index
    %c0_61 = arith.constant 0 : index
    %206 = vector.load %arg6[%c56_60, %c0_61] : memref<64x128xf32, #tpu.memory_space<vmem>>, vector<8x128xf32>
    tpu.vector_store %arg6[%c56_60, %c0_61], %205 {strides = array<i32>} : memref<64x128xf32, #tpu.memory_space<vmem>>, vector<8x128xf32>,
    return
  }
  func.func @transform_0(%arg0: i32) -> (i32, i32) {
    %c0_i32 = arith.constant 0 : i32
    %c0_i32_0 = arith.constant 0 : i32
    return %arg0, %c0_i32 : i32, i32
  }
  func.func @transform_1(%arg0: i32) -> (i32, i32) {
    %c0_i32 = arith.constant 0 : i32
    %c0_i32_0 = arith.constant 0 : i32
    %c0_i32_1 = arith.constant 0 : i32
    return %c0_i32, %c0_i32_0 : i32, i32
  }
  func.func @transform_2(%arg0: i32) -> (i32, i32) {
    %c0_i32 = arith.constant 0 : i32
    %c0_i32_0 = arith.constant 0 : i32
    %c0_i32_1 = arith.constant 0 : i32
    return %c0_i32, %c0_i32_0 : i32, i32
  }
  func.func @transform_3(%arg0: i32) -> (i32, i32) {
    %c0_i32 = arith.constant 0 : i32
    %c0_i32_0 = arith.constant 0 : i32
    %c0_i32_1 = arith.constant 0 : i32
    return %c0_i32, %c0_i32_0 : i32, i32
  }
  func.func @transform_4(%arg0: i32) -> (i32, i32) {
    %c0_i32 = arith.constant 0 : i32
    %c0_i32_0 = arith.constant 0 : i32
    %c0_i32_1 = arith.constant 0 : i32
    return %c0_i32, %c0_i32_0 : i32, i32
  }
  func.func @transform_5(%arg0: i32) -> (i32, i32) {
    %c0_i32 = arith.constant 0 : i32
    %c0_i32_0 = arith.constant 0 : i32
    return %arg0, %c0_i32 : i32, i32
  }
}

</mosaic_0001>

<llo_original>
// kernel: tpu_custom_call.1
$region0: #{tpu_custom_call.1}
  #allocation0 [shape = 'u32[]', space=smem, size = 0x4, offset = 0x4, fixed_abs, tag = 'smem constant byte address 0x4 - core index']
  #allocation1 [shape = 'u32[72,128]{1,0:T(1,128)}', space=vmem, size = 0x9000, scoped, tag = 'internal scratch']
  #allocation2 [shape = 'f32[64,512]{1,0:T(8,128)}', space=vmem, size = 0x20000, scoped, tag = 'scratch operand']
  %s0 = inlined_call_operand.vmem [shape: s32[64,1], index: 0, kind: input, shape index: {}]
  %s1 = inlined_call_operand.hbm [shape: bf16[128,512], index: 1, kind: input, shape index: {}]
  %s2 = inlined_call_operand.hbm [shape: bf16[128,512], index: 2, kind: input, shape index: {}]
  %s3 = inlined_call_operand.vmem [shape: bf16[128,128], index: 3, kind: input, shape index: {}]
  %s4 = inlined_call_operand.vmem [shape: f32[1,128], index: 4, kind: input, shape index: {}]
  %s5 = inlined_call_operand.hbm [shape: f32[64,128], index: 5, kind: output, shape index: {}]
  %s6 = sld [smem:[#allocation0]]
  $region38: #{tpu_custom_call.1} parent=0
    _
  %s8 = ssub.s32 1, %s6
  %s9 = scalar_select 0, %s8, %s6
  $region1: #{tpu_custom_call.1} parent=0
    #allocation3 [shape = 'u8[131072]{0}', space=vmem, size = 0x20000, scoped, tag = 'input window, operand 1, single buffered']
    #allocation4 [shape = 's32[1]{0}', space=sflag, size = 0x4, scoped, tag = 'scoped memory for tpu_custom_call.1']
    #allocation5 [shape = 's32[1]{0}', space=sflag, size = 0x4, scoped, tag = 'scoped memory for tpu_custom_call.1']
    #allocation6 [shape = 'u8[131072]{0}', space=vmem, size = 0x20000, scoped, tag = 'input window, operand 2, single buffered']
    #allocation7 [shape = 's32[1]{0}', space=sflag, size = 0x4, scoped, tag = 'scoped memory for tpu_custom_call.1']
    #allocation8 [shape = 'u8[32768]{0}', space=vmem, size = 0x8000, scoped, tag = 'output window, operand 0, single buffered']
    %10 = vsyncpa [#allocation4], 0
    %11 = vsyncpa [#allocation7], 0
    %12 = vsyncpa [#allocation5], 0
    // Predicated region
    $region2: #{tpu_custom_call.1} parent=1 // pred_check
      _
    $region3: #{tpu_custom_call.1} parent=1 // pred_check_branch
      %14 = sbr.rel (0) target = $region5
    $region4: #{tpu_custom_call.1} parent=1 // pred_region
      _
    $region5: #{tpu_custom_call.1} parent=1 // pred_fallthru
      _
    // Predicated region
    $region6: #{tpu_custom_call.1} parent=1 // pred_check
      _
    $region7: #{tpu_custom_call.1} parent=1 // pred_check_branch
      %16 = sbr.rel (0) target = $region9
    $region8: #{tpu_custom_call.1} parent=1 // pred_region
      %18 = vsyncadd [#allocation4], 0
      %s19 = sshll.u32 %s1, 4
      %s20 = int_to_ptr.hbm [resolvable:$true] %s19
      %s21 = sshll.u32 [#allocation3], 4
      %s22 = int_to_ptr.vmem [resolvable:$true] %s21
      %27 = dma.hbm_to_vmem [thread:$0]  %s20, 4096, %s22, [#allocation4], 256, 256, 16
    $region9: #{tpu_custom_call.1} parent=1 // pred_fallthru
      _
    // Predicated region
    $region10: #{tpu_custom_call.1} parent=1 // pred_check
      _
    $region11: #{tpu_custom_call.1} parent=1 // pred_check_branch
      %29 = sbr.rel (0) target = $region13
    $region12: #{tpu_custom_call.1} parent=1 // pred_region
      %31 = vsyncadd [#allocation7], 0
      %s32 = sshll.u32 %s2, 4
      %s33 = int_to_ptr.hbm [resolvable:$true] %s32
      %s34 = sshll.u32 [#allocation6], 4
      %s35 = int_to_ptr.vmem [resolvable:$true] %s34
      %40 = dma.hbm_to_vmem [thread:$0]  %s33, 4096, %s35, [#allocation7], 256, 256, 16
    $region13: #{tpu_custom_call.1} parent=1 // pred_fallthru
      _
    // Predicated region
    $region14: #{tpu_custom_call.1} parent=1 // pred_check
      _
    $region15: #{tpu_custom_call.1} parent=1 // pred_check_branch
      %42 = sbr.rel (0) target = $region17
    $region16: #{tpu_custom_call.1} parent=1 // pred_region
      _
    $region17: #{tpu_custom_call.1} parent=1 // pred_fallthru
      _
    // Predicated region
    $region18: #{tpu_custom_call.1} parent=1 // pred_check
      _
    $region19: #{tpu_custom_call.1} parent=1 // pred_check_branch
      %44 = sbr.rel (0) target = $region21
    $region20: #{tpu_custom_call.1} parent=1 // pred_region
      _
    $region21: #{tpu_custom_call.1} parent=1 // pred_fallthru
      _
    // Predicated region
    $region22: #{tpu_custom_call.1} parent=1 // pred_check
      _
    $region23: #{tpu_custom_call.1} parent=1 // pred_check_branch
      %46 = sbr.rel (0) target = $region25
    $region24: #{tpu_custom_call.1} parent=1 // pred_region
      %48 = dma.done [#allocation4], 4096
    $region25: #{tpu_custom_call.1} parent=1 // pred_fallthru
      _
    // Predicated region
    $region26: #{tpu_custom_call.1} parent=1 // pred_check
      _
    $region27: #{tpu_custom_call.1} parent=1 // pred_check_branch
      %50 = sbr.rel (0) target = $region29
    $region28: #{tpu_custom_call.1} parent=1 // pred_region
      %52 = dma.done [#allocation7], 4096
    $region29: #{tpu_custom_call.1} parent=1 // pred_fallthru
      _
    %v54 = vld [vmem:[%s0] sm:$0xff]
    %v55 = vld [vmem:[%s0 + $0x8] sm:$0xff]
    %v56 = vld [vmem:[%s0 + $0x10] sm:$0xff]
    %v57 = vld [vmem:[%s0 + $0x18] sm:$0xff]
    %v58 = vld [vmem:[%s0 + $0x20] sm:$0xff]
    %v59 = vld [vmem:[%s0 + $0x28] sm:$0xff]
    %v60 = vld [vmem:[%s0 + $0x30] sm:$0xff]
    %v61 = vld [vmem:[%s0 + $0x38] sm:$0xff]
    %v62 = vlaneseq
    %v63 = vand.u32 %v62, 127
    %64 = vset.pattern.permute.xlu0 0
    %65 = vperm.xlu0 %64, %v54
    %v66 = vpop.permute.xlu0 %65
    %67 = vset.pattern.permute.xlu0 0
    %68 = vperm.xlu0 %67, %v55
    %v69 = vpop.permute.xlu0 %68
    %70 = vset.pattern.permute.xlu0 0
    %71 = vperm.xlu0 %70, %v56
    %v72 = vpop.permute.xlu0 %71
    %73 = vset.pattern.permute.xlu0 0
    %74 = vperm.xlu0 %73, %v57
    %v75 = vpop.permute.xlu0 %74
    %76 = vset.pattern.permute.xlu0 0
    %77 = vperm.xlu0 %76, %v58
    %v78 = vpop.permute.xlu0 %77
    %79 = vset.pattern.permute.xlu0 0
    %80 = vperm.xlu0 %79, %v59
    %v81 = vpop.permute.xlu0 %80
    %82 = vset.pattern.permute.xlu0 0
    %83 = vperm.xlu0 %82, %v60
    %v84 = vpop.permute.xlu0 %83
    %85 = vset.pattern.permute.xlu0 0
    %86 = vperm.xlu0 %85, %v61
    %v87 = vpop.permute.xlu0 %86
    %vm88 = vcmp.eq.s32.totalorder %v63, %v66
    %vm89 = vcmp.eq.s32.totalorder %v63, %v69
    %vm90 = vcmp.eq.s32.totalorder %v63, %v72
    %vm91 = vcmp.eq.s32.totalorder %v63, %v75
    %vm92 = vcmp.eq.s32.totalorder %v63, %v78
    %vm93 = vcmp.eq.s32.totalorder %v63, %v81
    %vm94 = vcmp.eq.s32.totalorder %v63, %v84
    %vm95 = vcmp.eq.s32.totalorder %v63, %v87
    %v96 = vsel %vm88, 1, 0
    %v97 = vsel %vm89, 1, 0
    %v98 = vsel %vm90, 1, 0
    %v99 = vsel %vm91, 1, 0
    %v100 = vsel %vm92, 1, 0
    %v101 = vsel %vm93, 1, 0
    %v102 = vsel %vm94, 1, 0
    %v103 = vsel %vm95, 1, 0
    %v104 = vcvt.s32.f32 %v96
    %v105 = vcvt.s32.f32 %v97
    %v106 = vcvt.s32.f32 %v98
    %v107 = vcvt.s32.f32 %v99
    %v108 = vcvt.s32.f32 %v100
    %v109 = vcvt.s32.f32 %v101
    %v110 = vcvt.s32.f32 %v102
    %v111 = vcvt.s32.f32 %v103
    %v112 = vpack.c.bf16 %v105, %v104
    %v113 = vpack.c.bf16 %v107, %v106
    %v114 = vpack.c.bf16 %v109, %v108
    %v115 = vpack.c.bf16 %v111, %v110
    %v116 = vld [vmem:[#allocation3] sm:$0xff]
    %v117 = vld [vmem:[#allocation3 + $0x8] sm:$0xff]
    %v118 = vld [vmem:[#allocation3 + $0x10] sm:$0xff]
    %v119 = vld [vmem:[#allocation3 + $0x18] sm:$0xff]
    %v120 = vld [vmem:[#allocation3 + $0x20] sm:$0xff]
    %v121 = vld [vmem:[#allocation3 + $0x28] sm:$0xff]
    %v122 = vld [vmem:[#allocation3 + $0x30] sm:$0xff]
    %v123 = vld [vmem:[#allocation3 + $0x38] sm:$0xff]
    %v124 = vld [vmem:[#allocation3 + $0x40] sm:$0xff]
    %v125 = vld [vmem:[#allocation3 + $0x48] sm:$0xff]
    %v126 = vld [vmem:[#allocation3 + $0x50] sm:$0xff]
    %v127 = vld [vmem:[#allocation3 + $0x58] sm:$0xff]
    %v128 = vld [vmem:[#allocation3 + $0x60] sm:$0xff]
    %v129 = vld [vmem:[#allocation3 + $0x68] sm:$0xff]
    %v130 = vld [vmem:[#allocation3 + $0x70] sm:$0xff]
    %v131 = vld [vmem:[#allocation3 + $0x78] sm:$0xff]
    %v132 = vld [vmem:[#allocation3 + $0x80] sm:$0xff]
    %v133 = vld [vmem:[#allocation3 + $0x88] sm:$0xff]
    %v134 = vld [vmem:[#allocation3 + $0x90] sm:$0xff]
    %v135 = vld [vmem:[#allocation3 + $0x98] sm:$0xff]
    %v136 = vld [vmem:[#allocation3 + $0xa0] sm:$0xff]
    %v137 = vld [vmem:[#allocation3 + $0xa8] sm:$0xff]
    %v138 = vld [vmem:[#allocation3 + $0xb0] sm:$0xff]
    %v139 = vld [vmem:[#allocation3 + $0xb8] sm:$0xff]
    %v140 = vld [vmem:[#allocation3 + $0xc0] sm:$0xff]
    %v141 = vld [vmem:[#allocation3 + $0xc8] sm:$0xff]
    %v142 = vld [vmem:[#allocation3 + $0xd0] sm:$0xff]
    %v143 = vld [vmem:[#allocation3 + $0xd8] sm:$0xff]
    %v144 = vld [vmem:[#allocation3 + $0xe0] sm:$0xff]
    %v145 = vld [vmem:[#allocation3 + $0xe8] sm:$0xff]
    %v146 = vld [vmem:[#allocation3 + $0xf0] sm:$0xff]
    %v147 = vld [vmem:[#allocation3 + $0xf8] sm:$0xff]
    %v180 = vunpack.c.l.b16 %v116
    %v181 = vunpack.c.h.b16 %v116
    %v182 = vunpack.c.l.b16 %v117
    %v183 = vunpack.c.h.b16 %v117
    %v184 = vunpack.c.l.b16 %v118
    %v185 = vunpack.c.h.b16 %v118
    %v186 = vunpack.c.l.b16 %v119
    %v187 = vunpack.c.h.b16 %v119
    %v188 = vunpack.c.l.b16 %v120
    %v189 = vunpack.c.h.b16 %v120
    %v190 = vunpack.c.l.b16 %v121
    %v191 = vunpack.c.h.b16 %v121
    %v192 = vunpack.c.l.b16 %v122
    %v193 = vunpack.c.h.b16 %v122
    %v194 = vunpack.c.l.b16 %v123
    %v195 = vunpack.c.h.b16 %v123
    %v196 = vunpack.c.l.b16 %v124
    %v197 = vunpack.c.h.b16 %v124
    %v198 = vunpack.c.l.b16 %v125
    %v199 = vunpack.c.h.b16 %v125
    %v200 = vunpack.c.l.b16 %v126
    %v201 = vunpack.c.h.b16 %v126
    %v202 = vunpack.c.l.b16 %v127
    %v203 = vunpack.c.h.b16 %v127
    %v204 = vunpack.c.l.b16 %v128
    %v205 = vunpack.c.h.b16 %v128
    %v206 = vunpack.c.l.b16 %v129
    %v207 = vunpack.c.h.b16 %v129
    %v208 = vunpack.c.l.b16 %v130
    %v209 = vunpack.c.h.b16 %v130
    %v210 = vunpack.c.l.b16 %v131
    %v211 = vunpack.c.h.b16 %v131
    %v212 = vunpack.c.l.b16 %v132
    %v213 = vunpack.c.h.b16 %v132
    %v214 = vunpack.c.l.b16 %v133
    %v215 = vunpack.c.h.b16 %v133
    %v216 = vunpack.c.l.b16 %v134
    %v217 = vunpack.c.h.b16 %v134
    %v218 = vunpack.c.l.b16 %v135
    %v219 = vunpack.c.h.b16 %v135
    %v220 = vunpack.c.l.b16 %v136
    %v221 = vunpack.c.h.b16 %v136
    %v222 = vunpack.c.l.b16 %v137
    %v223 = vunpack.c.h.b16 %v137
    %v224 = vunpack.c.l.b16 %v138
    %v225 = vunpack.c.h.b16 %v138
    %v226 = vunpack.c.l.b16 %v139
    %v227 = vunpack.c.h.b16 %v139
    %v228 = vunpack.c.l.b16 %v140
    %v229 = vunpack.c.h.b16 %v140
    %v230 = vunpack.c.l.b16 %v141
    %v231 = vunpack.c.h.b16 %v141
    %v232 = vunpack.c.l.b16 %v142
    %v233 = vunpack.c.h.b16 %v142
    %v234 = vunpack.c.l.b16 %v143
    %v235 = vunpack.c.h.b16 %v143
    %v236 = vunpack.c.l.b16 %v144
    %v237 = vunpack.c.h.b16 %v144
    %v238 = vunpack.c.l.b16 %v145
    %v239 = vunpack.c.h.b16 %v145
    %v240 = vunpack.c.l.b16 %v146
    %v241 = vunpack.c.h.b16 %v146
    %v242 = vunpack.c.l.b16 %v147
    %v243 = vunpack.c.h.b16 %v147
    %v244 = vpack.c.b16 %v184, %v180
    %v245 = vpack.c.b16 %v185, %v181
    %v246 = vpack.c.b16 %v186, %v182
    %v247 = vpack.c.b16 %v187, %v183
    %v248 = vpack.c.b16 %v192, %v188
    %v249 = vpack.c.b16 %v193, %v189
    %v250 = vpack.c.b16 %v194, %v190
    %v251 = vpack.c.b16 %v195, %v191
    %v252 = vpack.c.b16 %v200, %v196
    %v253 = vpack.c.b16 %v201, %v197
    %v254 = vpack.c.b16 %v202, %v198
    %v255 = vpack.c.b16 %v203, %v199
    %v256 = vpack.c.b16 %v208, %v204
    %v257 = vpack.c.b16 %v209, %v205
    %v258 = vpack.c.b16 %v210, %v206
    %v259 = vpack.c.b16 %v211, %v207
    %v260 = vpack.c.b16 %v216, %v212
    %v261 = vpack.c.b16 %v217, %v213
    %v262 = vpack.c.b16 %v218, %v214
    %v263 = vpack.c.b16 %v219, %v215
    %v264 = vpack.c.b16 %v224, %v220
    %v265 = vpack.c.b16 %v225, %v221
    %v266 = vpack.c.b16 %v226, %v222
    %v267 = vpack.c.b16 %v227, %v223
    %v268 = vpack.c.b16 %v232, %v228
    %v269 = vpack.c.b16 %v233, %v229
    %v270 = vpack.c.b16 %v234, %v230
    %v271 = vpack.c.b16 %v235, %v231
    %v272 = vpack.c.b16 %v240, %v236
    %v273 = vpack.c.b16 %v241, %v237
    %v274 = vpack.c.b16 %v242, %v238
    %v275 = vpack.c.b16 %v243, %v239
    %308 = vmatpush.bf16.msra.mxu0 %v272
    %309 = vmatpush.bf16.msra.mxu0 %v268
    %310 = vmatpush.bf16.msra.mxu0 %v264
    %311 = vmatpush.bf16.msra.mxu0 %v260
    %312 = vmatpush.bf16.msra.mxu0 %v256
    %313 = vmatpush.bf16.msra.mxu0 %v252
    %314 = vmatpush.bf16.msra.mxu0 %v248
    %315 = vmatpush.bf16.msra.mxu0 %v244
    %316 = vmatmul.bf16.gmra.mxu0 %v112
    %v317 = vpop.f32.mrf.mxu0
    %v318 = vadd.f32 0.0, %v317
    %v319 = vpop.f32.mrf.mxu0
    %v320 = vadd.f32 0.0, %v319
    %321 = vmatmul.bf16.gmra.mxu0 %v113
    %v322 = vpop.f32.mrf.mxu0
    %v323 = vadd.f32 0.0, %v322
    %v324 = vpop.f32.mrf.mxu0
    %v325 = vadd.f32 0.0, %v324
    %326 = vmatmul.bf16.gmra.mxu0 %v114
    %v327 = vpop.f32.mrf.mxu0
    %v328 = vadd.f32 0.0, %v327
    %v329 = vpop.f32.mrf.mxu0
    %v330 = vadd.f32 0.0, %v329
    %331 = vmatmul.bf16.gmra.mxu0 %v115
    %v332 = vpop.f32.mrf.mxu0
    %v333 = vadd.f32 0.0, %v332
    %v334 = vpop.f32.mrf.mxu0
    %v335 = vadd.f32 0.0, %v334
    %336 = vdwg.mxu0
    %337 = vmatpush.bf16.msra.mxu0 %v273
    %338 = vmatpush.bf16.msra.mxu0 %v269
    %339 = vmatpush.bf16.msra.mxu0 %v265
    %340 = vmatpush.bf16.msra.mxu0 %v261
    %341 = vmatpush.bf16.msra.mxu0 %v257
    %342 = vmatpush.bf16.msra.mxu0 %v253
    %343 = vmatpush.bf16.msra.mxu0 %v249
    %344 = vmatpush.bf16.msra.mxu0 %v245
    %345 = vmatmul.bf16.gmra.mxu0 %v112
    %v346 = vpop.f32.mrf.mxu0
    %v347 = vadd.f32 0.0, %v346
    %v348 = vpop.f32.mrf.mxu0
    %v349 = vadd.f32 0.0, %v348
    %350 = vmatmul.bf16.gmra.mxu0 %v113
    %v351 = vpop.f32.mrf.mxu0
    %v352 = vadd.f32 0.0, %v351
    %v353 = vpop.f32.mrf.mxu0
    %v354 = vadd.f32 0.0, %v353
    %355 = vmatmul.bf16.gmra.mxu0 %v114
    %v356 = vpop.f32.mrf.mxu0
    %v357 = vadd.f32 0.0, %v356
    %v358 = vpop.f32.mrf.mxu0
    %v359 = vadd.f32 0.0, %v358
    %360 = vmatmul.bf16.gmra.mxu0 %v115
    %v361 = vpop.f32.mrf.mxu0
    %v362 = vadd.f32 0.0, %v361
    %v363 = vpop.f32.mrf.mxu0
    %v364 = vadd.f32 0.0, %v363
    %365 = vdwg.mxu0
    %366 = vmatpush.bf16.msra.mxu0 %v274
    %367 = vmatpush.bf16.msra.mxu0 %v270
    %368 = vmatpush.bf16.msra.mxu0 %v266
    %369 = vmatpush.bf16.msra.mxu0 %v262
    %370 = vmatpush.bf16.msra.mxu0 %v258
    %371 = vmatpush.bf16.msra.mxu0 %v254
    %372 = vmatpush.bf16.msra.mxu0 %v250
    %373 = vmatpush.bf16.msra.mxu0 %v246
    %374 = vmatmul.bf16.gmra.mxu0 %v112
    %v375 = vpop.f32.mrf.mxu0
    %v376 = vadd.f32 0.0, %v375
    %v377 = vpop.f32.mrf.mxu0
    %v378 = vadd.f32 0.0, %v377
    %379 = vmatmul.bf16.gmra.mxu0 %v113
    %v380 = vpop.f32.mrf.mxu0
    %v381 = vadd.f32 0.0, %v380
    %v382 = vpop.f32.mrf.mxu0
    %v383 = vadd.f32 0.0, %v382
    %384 = vmatmul.bf16.gmra.mxu0 %v114
    %v385 = vpop.f32.mrf.mxu0
    %v386 = vadd.f32 0.0, %v385
    %v387 = vpop.f32.mrf.mxu0
    %v388 = vadd.f32 0.0, %v387
    %389 = vmatmul.bf16.gmra.mxu0 %v115
    %v390 = vpop.f32.mrf.mxu0
    %v391 = vadd.f32 0.0, %v390
    %v392 = vpop.f32.mrf.mxu0
    %v393 = vadd.f32 0.0, %v392
    %394 = vdwg.mxu0
    %395 = vmatpush.bf16.msra.mxu0 %v275
    %396 = vmatpush.bf16.msra.mxu0 %v271
    %397 = vmatpush.bf16.msra.mxu0 %v267
    %398 = vmatpush.bf16.msra.mxu0 %v263
    %399 = vmatpush.bf16.msra.mxu0 %v259
    %400 = vmatpush.bf16.msra.mxu0 %v255
    %401 = vmatpush.bf16.msra.mxu0 %v251
    %402 = vmatpush.bf16.msra.mxu0 %v247
    %403 = vmatmul.bf16.gmra.mxu0 %v112
    %v404 = vpop.f32.mrf.mxu0
    %v405 = vadd.f32 0.0, %v404
    %v406 = vpop.f32.mrf.mxu0
    %v407 = vadd.f32 0.0, %v406
    %408 = vmatmul.bf16.gmra.mxu0 %v113
    %v409 = vpop.f32.mrf.mxu0
    %v410 = vadd.f32 0.0, %v409
    %v411 = vpop.f32.mrf.mxu0
    %v412 = vadd.f32 0.0, %v411
    %413 = vmatmul.bf16.gmra.mxu0 %v114
    %v414 = vpop.f32.mrf.mxu0
    %v415 = vadd.f32 0.0, %v414
    %v416 = vpop.f32.mrf.mxu0
    %v417 = vadd.f32 0.0, %v416
    %418 = vmatmul.bf16.gmra.mxu0 %v115
    %v419 = vpop.f32.mrf.mxu0
    %v420 = vadd.f32 0.0, %v419
    %v421 = vpop.f32.mrf.mxu0
    %v422 = vadd.f32 0.0, %v421
    %423 = vdwg.mxu0
    %424 = vst [vmem:[#allocation2] sm:$0xff] %v318
    %425 = vst [vmem:[#allocation2 + $0x8] sm:$0xff] %v347
    %426 = vst [vmem:[#allocation2 + $0x10] sm:$0xff] %v376
    %427 = vst [vmem:[#allocation2 + $0x18] sm:$0xff] %v405
    %428 = vst [vmem:[#allocation2 + $0x20] sm:$0xff] %v320
    %429 = vst [vmem:[#allocation2 + $0x28] sm:$0xff] %v349
    %430 = vst [vmem:[#allocation2 + $0x30] sm:$0xff] %v378
    %431 = vst [vmem:[#allocation2 + $0x38] sm:$0xff] %v407
    %432 = vst [vmem:[#allocation2 + $0x40] sm:$0xff] %v323
    %433 = vst [vmem:[#allocation2 + $0x48] sm:$0xff] %v352
    %434 = vst [vmem:[#allocation2 + $0x50] sm:$0xff] %v381
    %435 = vst [vmem:[#allocation2 + $0x58] sm:$0xff] %v410
    %436 = vst [vmem:[#allocation2 + $0x60] sm:$0xff] %v325
    %437 = vst [vmem:[#allocation2 + $0x68] sm:$0xff] %v354
    %438 = vst [vmem:[#allocation2 + $0x70] sm:$0xff] %v383
    %439 = vst [vmem:[#allocation2 + $0x78] sm:$0xff] %v412
    %440 = vst [vmem:[#allocation2 + $0x80] sm:$0xff] %v328
    %441 = vst [vmem:[#allocation2 + $0x88] sm:$0xff] %v357
    %442 = vst [vmem:[#allocation2 + $0x90] sm:$0xff] %v386
    %443 = vst [vmem:[#allocation2 + $0x98] sm:$0xff] %v415
    %444 = vst [vmem:[#allocation2 + $0xa0] sm:$0xff] %v330
    %445 = vst [vmem:[#allocation2 + $0xa8] sm:$0xff] %v359
    %446 = vst [vmem:[#allocation2 + $0xb0] sm:$0xff] %v388
    %447 = vst [vmem:[#allocation2 + $0xb8] sm:$0xff] %v417
    %448 = vst [vmem:[#allocation2 + $0xc0] sm:$0xff] %v333
    %449 = vst [vmem:[#allocation2 + $0xc8] sm:$0xff] %v362
    %450 = vst [vmem:[#allocation2 + $0xd0] sm:$0xff] %v391
    %451 = vst [vmem:[#allocation2 + $0xd8] sm:$0xff] %v420
    %452 = vst [vmem:[#allocation2 + $0xe0] sm:$0xff] %v335
    %453 = vst [vmem:[#allocation2 + $0xe8] sm:$0xff] %v364
    %454 = vst [vmem:[#allocation2 + $0xf0] sm:$0xff] %v393
    %455 = vst [vmem:[#allocation2 + $0xf8] sm:$0xff] %v422
    %v456 = vld [vmem:[#allocation6] sm:$0xff]
    %v457 = vld [vmem:[#allocation6 + $0x8] sm:$0xff]
    %v458 = vld [vmem:[#allocation6 + $0x10] sm:$0xff]
    %v459 = vld [vmem:[#allocation6 + $0x18] sm:$0xff]
    %v460 = vld [vmem:[#allocation6 + $0x20] sm:$0xff]
    %v461 = vld [vmem:[#allocation6 + $0x28] sm:$0xff]
    %v462 = vld [vmem:[#allocation6 + $0x30] sm:$0xff]
    %v463 = vld [vmem:[#allocation6 + $0x38] sm:$0xff]
    %v464 = vld [vmem:[#allocation6 + $0x40] sm:$0xff]
    %v465 = vld [vmem:[#allocation6 + $0x48] sm:$0xff]
    %v466 = vld [vmem:[#allocation6 + $0x50] sm:$0xff]
    %v467 = vld [vmem:[#allocation6 + $0x58] sm:$0xff]
    %v468 = vld [vmem:[#allocation6 + $0x60] sm:$0xff]
    %v469 = vld [vmem:[#allocation6 + $0x68] sm:$0xff]
    %v470 = vld [vmem:[#allocation6 + $0x70] sm:$0xff]
    %v471 = vld [vmem:[#allocation6 + $0x78] sm:$0xff]
    %v472 = vld [vmem:[#allocation6 + $0x80] sm:$0xff]
    %v473 = vld [vmem:[#allocation6 + $0x88] sm:$0xff]
    %v474 = vld [vmem:[#allocation6 + $0x90] sm:$0xff]
    %v475 = vld [vmem:[#allocation6 + $0x98] sm:$0xff]
    %v476 = vld [vmem:[#allocation6 + $0xa0] sm:$0xff]
    %v477 = vld [vmem:[#allocation6 + $0xa8] sm:$0xff]
    %v478 = vld [vmem:[#allocation6 + $0xb0] sm:$0xff]
    %v479 = vld [vmem:[#allocation6 + $0xb8] sm:$0xff]
    %v480 = vld [vmem:[#allocation6 + $0xc0] sm:$0xff]
    %v481 = vld [vmem:[#allocation6 + $0xc8] sm:$0xff]
    %v482 = vld [vmem:[#allocation6 + $0xd0] sm:$0xff]
    %v483 = vld [vmem:[#allocation6 + $0xd8] sm:$0xff]
    %v484 = vld [vmem:[#allocation6 + $0xe0] sm:$0xff]
    %v485 = vld [vmem:[#allocation6 + $0xe8] sm:$0xff]
    %v486 = vld [vmem:[#allocation6 + $0xf0] sm:$0xff]
    %v487 = vld [vmem:[#allocation6 + $0xf8] sm:$0xff]
    %v488 = vld [vmem:[%s3] sm:$0xf]
    %v489 = vld [vmem:[%s3 + $0x4] sm:$0xf]
    %v490 = vld [vmem:[%s3 + $0x8] sm:$0xf]
    %v491 = vld [vmem:[%s3 + $0xc] sm:$0xf]
    %v492 = vld [vmem:[%s3 + $0x10] sm:$0xf]
    %v493 = vld [vmem:[%s3 + $0x14] sm:$0xf]
    %v494 = vld [vmem:[%s3 + $0x18] sm:$0xf]
    %v495 = vld [vmem:[%s3 + $0x1c] sm:$0xf]
    %v496 = vld [vmem:[%s3 + $0x20] sm:$0xf]
    %v497 = vld [vmem:[%s3 + $0x24] sm:$0xf]
    %v498 = vld [vmem:[%s3 + $0x28] sm:$0xf]
    %v499 = vld [vmem:[%s3 + $0x2c] sm:$0xf]
    %v500 = vld [vmem:[%s3 + $0x30] sm:$0xf]
    %v501 = vld [vmem:[%s3 + $0x34] sm:$0xf]
    %v502 = vld [vmem:[%s3 + $0x38] sm:$0xf]
    %v503 = vld [vmem:[%s3 + $0x3c] sm:$0xf]
    %v504 = vld [vmem:[%s4] sm:$0x1]
    %v505 = vld [vmem:[#allocation2] sm:$0xff]
    %v506 = vld [vmem:[#allocation2 + $0x8] sm:$0xff]
    %v507 = vld [vmem:[#allocation2 + $0x10] sm:$0xff]
    %v508 = vld [vmem:[#allocation2 + $0x18] sm:$0xff]
    %v541 = vunpack.c.l.b16 %v456
    %v542 = vunpack.c.h.b16 %v456
    %v543 = vunpack.c.l.b16 %v457
    %v544 = vunpack.c.h.b16 %v457
    %v545 = vunpack.c.l.b16 %v458
    %v546 = vunpack.c.h.b16 %v458
    %v547 = vunpack.c.l.b16 %v459
    %v548 = vunpack.c.h.b16 %v459
    %v549 = vunpack.c.l.b16 %v460
    %v550 = vunpack.c.h.b16 %v460
    %v551 = vunpack.c.l.b16 %v461
    %v552 = vunpack.c.h.b16 %v461
    %v553 = vunpack.c.l.b16 %v462
    %v554 = vunpack.c.h.b16 %v462
    %v555 = vunpack.c.l.b16 %v463
    %v556 = vunpack.c.h.b16 %v463
    %v557 = vunpack.c.l.b16 %v464
    %v558 = vunpack.c.h.b16 %v464
    %v559 = vunpack.c.l.b16 %v465
    %v560 = vunpack.c.h.b16 %v465
    %v561 = vunpack.c.l.b16 %v466
    %v562 = vunpack.c.h.b16 %v466
    %v563 = vunpack.c.l.b16 %v467
    %v564 = vunpack.c.h.b16 %v467
    %v565 = vunpack.c.l.b16 %v468
    %v566 = vunpack.c.h.b16 %v468
    %v567 = vunpack.c.l.b16 %v469
    %v568 = vunpack.c.h.b16 %v469
    %v569 = vunpack.c.l.b16 %v470
    %v570 = vunpack.c.h.b16 %v470
    %v571 = vunpack.c.l.b16 %v471
    %v572 = vunpack.c.h.b16 %v471
    %v573 = vunpack.c.l.b16 %v472
    %v574 = vunpack.c.h.b16 %v472
    %v575 = vunpack.c.l.b16 %v473
    %v576 = vunpack.c.h.b16 %v473
    %v577 = vunpack.c.l.b16 %v474
    %v578 = vunpack.c.h.b16 %v474
    %v579 = vunpack.c.l.b16 %v475
    %v580 = vunpack.c.h.b16 %v475
    %v581 = vunpack.c.l.b16 %v476
    %v582 = vunpack.c.h.b16 %v476
    %v583 = vunpack.c.l.b16 %v477
    %v584 = vunpack.c.h.b16 %v477
    %v585 = vunpack.c.l.b16 %v478
    %v586 = vunpack.c.h.b16 %v478
    %v587 = vunpack.c.l.b16 %v479
    %v588 = vunpack.c.h.b16 %v479
    %v589 = vunpack.c.l.b16 %v480
    %v590 = vunpack.c.h.b16 %v480
    %v591 = vunpack.c.l.b16 %v481
    %v592 = vunpack.c.h.b16 %v481
    %v593 = vunpack.c.l.b16 %v482
    %v594 = vunpack.c.h.b16 %v482
    %v595 = vunpack.c.l.b16 %v483
    %v596 = vunpack.c.h.b16 %v483
    %v597 = vunpack.c.l.b16 %v484
    %v598 = vunpack.c.h.b16 %v484
    %v599 = vunpack.c.l.b16 %v485
    %v600 = vunpack.c.h.b16 %v485
    %v601 = vunpack.c.l.b16 %v486
    %v602 = vunpack.c.h.b16 %v486
    %v603 = vunpack.c.l.b16 %v487
    %v604 = vunpack.c.h.b16 %v487
    %v605 = vpack.c.b16 %v545, %v541
    %v606 = vpack.c.b16 %v546, %v542
    %v607 = vpack.c.b16 %v547, %v543
    %v608 = vpack.c.b16 %v548, %v544
    %v609 = vpack.c.b16 %v553, %v549
    %v610 = vpack.c.b16 %v554, %v550
    %v611 = vpack.c.b16 %v555, %v551
    %v612 = vpack.c.b16 %v556, %v552
    %v613 = vpack.c.b16 %v561, %v557
    %v614 = vpack.c.b16 %v562, %v558
    %v615 = vpack.c.b16 %v563, %v559
    %v616 = vpack.c.b16 %v564, %v560
    %v617 = vpack.c.b16 %v569, %v565
    %v618 = vpack.c.b16 %v570, %v566
    %v619 = vpack.c.b16 %v571, %v567
    %v620 = vpack.c.b16 %v572, %v568
    %v621 = vpack.c.b16 %v577, %v573
    %v622 = vpack.c.b16 %v578, %v574
    %v623 = vpack.c.b16 %v579, %v575
    %v624 = vpack.c.b16 %v580, %v576
    %v625 = vpack.c.b16 %v585, %v581
    %v626 = vpack.c.b16 %v586, %v582
    %v627 = vpack.c.b16 %v587, %v583
    %v628 = vpack.c.b16 %v588, %v584
    %v629 = vpack.c.b16 %v593, %v589
    %v630 = vpack.c.b16 %v594, %v590
    %v631 = vpack.c.b16 %v595, %v591
    %v632 = vpack.c.b16 %v596, %v592
    %v633 = vpack.c.b16 %v601, %v597
    %v634 = vpack.c.b16 %v602, %v598
    %v635 = vpack.c.b16 %v603, %v599
    %v636 = vpack.c.b16 %v604, %v600
    %669 = vmatpush.bf16.msra.mxu0 %v633
    %670 = vmatpush.bf16.msra.mxu0 %v629
    %671 = vmatpush.bf16.msra.mxu0 %v625
    %672 = vmatpush.bf16.msra.mxu0 %v621
    %673 = vmatpush.bf16.msra.mxu0 %v617
    %674 = vmatpush.bf16.msra.mxu0 %v613
    %675 = vmatpush.bf16.msra.mxu0 %v609
    %676 = vmatpush.bf16.msra.mxu0 %v605
    %677 = vmatmul.bf16.gmra.mxu0 0
    %v678 = vpop.f32.mrf.mxu0
    %v679 = vadd.f32 0.0, %v678
    %v680 = vpop.f32.mrf.mxu0
    %681 = vdwg.mxu0
    %682 = vmatpush.bf16.msra.mxu0 %v634
    %683 = vmatpush.bf16.msra.mxu0 %v630
    %684 = vmatpush.bf16.msra.mxu0 %v626
    %685 = vmatpush.bf16.msra.mxu0 %v622
    %686 = vmatpush.bf16.msra.mxu0 %v618
    %687 = vmatpush.bf16.msra.mxu0 %v614
    %688 = vmatpush.bf16.msra.mxu0 %v610
    %689 = vmatpush.bf16.msra.mxu0 %v606
    %690 = vmatmul.bf16.gmra.mxu0 0
    %v691 = vpop.f32.mrf.mxu0
    %v692 = vadd.f32 0.0, %v691
    %v693 = vpop.f32.mrf.mxu0
    %694 = vdwg.mxu0
    %695 = vmatpush.bf16.msra.mxu0 %v635
    %696 = vmatpush.bf16.msra.mxu0 %v631
    %697 = vmatpush.bf16.msra.mxu0 %v627
    %698 = vmatpush.bf16.msra.mxu0 %v623
    %699 = vmatpush.bf16.msra.mxu0 %v619
    %700 = vmatpush.bf16.msra.mxu0 %v615
    %701 = vmatpush.bf16.msra.mxu0 %v611
    %702 = vmatpush.bf16.msra.mxu0 %v607
    %703 = vmatmul.bf16.gmra.mxu0 0
    %v704 = vpop.f32.mrf.mxu0
    %v705 = vadd.f32 0.0, %v704
    %v706 = vpop.f32.mrf.mxu0
    %707 = vdwg.mxu0
    %708 = vmatpush.bf16.msra.mxu0 %v636
    %709 = vmatpush.bf16.msra.mxu0 %v632
    %710 = vmatpush.bf16.msra.mxu0 %v628
    %711 = vmatpush.bf16.msra.mxu0 %v624
    %712 = vmatpush.bf16.msra.mxu0 %v620
    %713 = vmatpush.bf16.msra.mxu0 %v616
    %714 = vmatpush.bf16.msra.mxu0 %v612
    %715 = vmatpush.bf16.msra.mxu0 %v608
    %716 = vmatmul.bf16.gmra.mxu0 0
    %v717 = vpop.f32.mrf.mxu0
    %v718 = vadd.f32 0.0, %v717
    %v719 = vpop.f32.mrf.mxu0
    %720 = vdwg.mxu0
    %v721 = vadd.f32 %v505, %v679
    %v722 = vadd.f32 %v506, %v692
    %v723 = vadd.f32 %v507, %v705
    %v724 = vadd.f32 %v508, %v718
    %v725 = vxor.u32 %v721, 2147483648
    %v726 = vxor.u32 %v722, 2147483648
    %v727 = vxor.u32 %v723, 2147483648
    %v728 = vmul.f32 %v725, 1.442695
    %v729 = vpow.pop %v728
    %v730 = vmul.f32 %v726, 1.442695
    %v731 = vpow.pop %v730
    %v732 = vmul.f32 %v727, 1.442695
    %v733 = vpow.pop %v732
    %v734 = vadd.f32 %v729, 1.0
    %v735 = vadd.f32 %v731, 1.0
    %v736 = vadd.f32 %v733, 1.0
    %v737 = vrcp.pop %v734
    %v738 = vmul.f32 %v734, %v737
    %v739 = vsub.f32 1.0, %v738
    %v740 = vmul.f32 %v737, %v739
    %v741 = vadd.f32 %v737, %v740
    %vm742 = vweird.f32 %v734
    %vm743 = vweird.f32 %v737
    %vm744 = vmor %vm742, %vm743
    %v745 = vsel %vm744, %v737, %v741
    %v746 = vand.u32 2147483647, %v734
    %vm747 = vcmp.eq.f32.partialorder %v746, 8.507059e+37
    %v748 = vand.u32 %v734, 2147483648
    %v749 = vor.u32 1.1754944e-38, %v748
    %v750 = vsel %vm747, %v749, %v745
    %v751 = vmul.f32 1.0, %v750
    %v752 = vrcp.pop %v735
    %v753 = vmul.f32 %v735, %v752
    %v754 = vsub.f32 1.0, %v753
    %v755 = vmul.f32 %v752, %v754
    %v756 = vadd.f32 %v752, %v755
    %vm757 = vweird.f32 %v735
    %vm758 = vweird.f32 %v752
    %vm759 = vmor %vm757, %vm758
    %v760 = vsel %vm759, %v752, %v756
    %v761 = vand.u32 2147483647, %v735
    %vm762 = vcmp.eq.f32.partialorder %v761, 8.507059e+37
    %v763 = vand.u32 %v735, 2147483648
    %v764 = vor.u32 1.1754944e-38, %v763
    %v765 = vsel %vm762, %v764, %v760
    %v766 = vmul.f32 1.0, %v765
    %v767 = vrcp.pop %v736
    %v768 = vmul.f32 %v736, %v767
    %v769 = vsub.f32 1.0, %v768
    %v770 = vmul.f32 %v767, %v769
    %v771 = vadd.f32 %v767, %v770
    %vm772 = vweird.f32 %v736
    %vm773 = vweird.f32 %v767
    %vm774 = vmor %vm772, %vm773
    %v775 = vsel %vm774, %v767, %v771
    %v776 = vand.u32 2147483647, %v736
    %vm777 = vcmp.eq.f32.partialorder %v776, 8.507059e+37
    %v778 = vand.u32 %v736, 2147483648
    %v779 = vor.u32 1.1754944e-38, %v778
    %v780 = vsel %vm777, %v779, %v775
    %v781 = vmul.f32 1.0, %v780
    %v782 = vtanh.pop %v724
    %v783 = vmul.f32 %v766, 0.0
    %v784 = vmul.f32 %v751, %v782
    %v785 = vadd.f32 %v783, %v784
    %v786 = vtanh.pop %v785
    %v787 = vmul.f32 %v781, %v786
    %v788 = vpack.c.bf16 %v787, %v787
    %v790 = vperm.slane %v504, 0
    %v808 = vunpack.c.l.b16 %v488
    %v809 = vunpack.c.l.b16 %v489
    %v810 = vunpack.c.l.b16 %v490
    %v811 = vunpack.c.l.b16 %v491
    %v812 = vunpack.c.l.b16 %v492
    %v813 = vunpack.c.l.b16 %v493
    %v814 = vunpack.c.l.b16 %v494
    %v815 = vunpack.c.l.b16 %v495
    %v816 = vunpack.c.l.b16 %v496
    %v817 = vunpack.c.l.b16 %v497
    %v818 = vunpack.c.l.b16 %v498
    %v819 = vunpack.c.l.b16 %v499
    %v820 = vunpack.c.l.b16 %v500
    %v821 = vunpack.c.l.b16 %v501
    %v822 = vunpack.c.l.b16 %v502
    %v823 = vunpack.c.l.b16 %v503
    %v824 = vpack.c.b16 %v809, %v808
    %v825 = vpack.c.b16 %v811, %v810
    %v826 = vpack.c.b16 %v813, %v812
    %v827 = vpack.c.b16 %v815, %v814
    %v828 = vpack.c.b16 %v817, %v816
    %v829 = vpack.c.b16 %v819, %v818
    %v830 = vpack.c.b16 %v821, %v820
    %v831 = vpack.c.b16 %v823, %v822
    %840 = vmatpush.bf16.msra.mxu0 %v831
    %841 = vmatpush.bf16.msra.mxu0 %v830
    %842 = vmatpush.bf16.msra.mxu0 %v829
    %843 = vmatpush.bf16.msra.mxu0 %v828
    %844 = vmatpush.bf16.msra.mxu0 %v827
    %845 = vmatpush.bf16.msra.mxu0 %v826
    %846 = vmatpush.bf16.msra.mxu0 %v825
    %847 = vmatpush.bf16.msra.mxu0 %v824
    %848 = vmatmul.bf16.gmra.mxu0 %v788
    %v849 = vpop.f32.mrf.mxu0
    %v850 = vadd.f32 %v790, %v849
    %v851 = vpop.f32.mrf.mxu0
    %852 = vdwg.mxu0
    %853 = vst [vmem:[#allocation8] sm:$0xff] %v850
    %v854 = vld [vmem:[#allocation2 + $0x20] sm:$0xff]
    %v855 = vld [vmem:[#allocation2 + $0x28] sm:$0xff]
    %v856 = vld [vmem:[#allocation2 + $0x30] sm:$0xff]
    %v857 = vld [vmem:[#allocation2 + $0x38] sm:$0xff]
    %858 = vmatpush.bf16.msra.mxu0 %v633
    %859 = vmatpush.bf16.msra.mxu0 %v629
    %860 = vmatpush.bf16.msra.mxu0 %v625
    %861 = vmatpush.bf16.msra.mxu0 %v621
    %862 = vmatpush.bf16.msra.mxu0 %v617
    %863 = vmatpush.bf16.msra.mxu0 %v613
    %864 = vmatpush.bf16.msra.mxu0 %v609
    %865 = vmatpush.bf16.msra.mxu0 %v605
    %866 = vmatmul.bf16.gmra.mxu0 %v788
    %v867 = vpop.f32.mrf.mxu0
    %v868 = vadd.f32 0.0, %v867
    %v869 = vpop.f32.mrf.mxu0
    %870 = vdwg.mxu0
    %871 = vmatpush.bf16.msra.mxu0 %v634
    %872 = vmatpush.bf16.msra.mxu0 %v630
    %873 = vmatpush.bf16.msra.mxu0 %v626
    %874 = vmatpush.bf16.msra.mxu0 %v622
    %875 = vmatpush.bf16.msra.mxu0 %v618
    %876 = vmatpush.bf16.msra.mxu0 %v614
    %877 = vmatpush.bf16.msra.mxu0 %v610
    %878 = vmatpush.bf16.msra.mxu0 %v606
    %879 = vmatmul.bf16.gmra.mxu0 %v788
    %v880 = vpop.f32.mrf.mxu0
    %v881 = vadd.f32 0.0, %v880
    %v882 = vpop.f32.mrf.mxu0
    %883 = vdwg.mxu0
    %884 = vmatpush.bf16.msra.mxu0 %v635
    %885 = vmatpush.bf16.msra.mxu0 %v631
    %886 = vmatpush.bf16.msra.mxu0 %v627
    %887 = vmatpush.bf16.msra.mxu0 %v623
    %888 = vmatpush.bf16.msra.mxu0 %v619
    %889 = vmatpush.bf16.msra.mxu0 %v615
    %890 = vmatpush.bf16.msra.mxu0 %v611
    %891 = vmatpush.bf16.msra.mxu0 %v607
    %892 = vmatmul.bf16.gmra.mxu0 %v788
    %v893 = vpop.f32.mrf.mxu0
    %v894 = vadd.f32 0.0, %v893
    %v895 = vpop.f32.mrf.mxu0
    %896 = vdwg.mxu0
    %897 = vmatpush.bf16.msra.mxu0 %v636
    %898 = vmatpush.bf16.msra.mxu0 %v632
    %899 = vmatpush.bf16.msra.mxu0 %v628
    %900 = vmatpush.bf16.msra.mxu0 %v624
    %901 = vmatpush.bf16.msra.mxu0 %v620
    %902 = vmatpush.bf16.msra.mxu0 %v616
    %903 = vmatpush.bf16.msra.mxu0 %v612
    %904 = vmatpush.bf16.msra.mxu0 %v608
    %905 = vmatmul.bf16.gmra.mxu0 %v788
    %v906 = vpop.f32.mrf.mxu0
    %v907 = vadd.f32 0.0, %v906
    %v908 = vpop.f32.mrf.mxu0
    %909 = vdwg.mxu0
    %v910 = vadd.f32 %v854, %v868
    %v911 = vadd.f32 %v855, %v881
    %v912 = vadd.f32 %v856, %v894
    %v913 = vadd.f32 %v857, %v907
    %v914 = vxor.u32 %v910, 2147483648
    %v915 = vxor.u32 %v911, 2147483648
    %v916 = vxor.u32 %v912, 2147483648
    %v917 = vmul.f32 %v914, 1.442695
    %v918 = vpow.pop %v917
    %v919 = vmul.f32 %v915, 1.442695
    %v920 = vpow.pop %v919
    %v921 = vmul.f32 %v916, 1.442695
    %v922 = vpow.pop %v921
    %v923 = vadd.f32 %v918, 1.0
    %v924 = vadd.f32 %v920, 1.0
    %v925 = vadd.f32 %v922, 1.0
    %v926 = vrcp.pop %v923
    %v927 = vmul.f32 %v923, %v926
    %v928 = vsub.f32 1.0, %v927
    %v929 = vmul.f32 %v926, %v928
    %v930 = vadd.f32 %v926, %v929
    %vm931 = vweird.f32 %v923
    %vm932 = vweird.f32 %v926
    %vm933 = vmor %vm931, %vm932
    %v934 = vsel %vm933, %v926, %v930
    %v935 = vand.u32 2147483647, %v923
    %vm936 = vcmp.eq.f32.partialorder %v935, 8.507059e+37
    %v937 = vand.u32 %v923, 2147483648
    %v938 = vor.u32 1.1754944e-38, %v937
    %v939 = vsel %vm936, %v938, %v934
    %v940 = vmul.f32 1.0, %v939
    %v941 = vrcp.pop %v924
    %v942 = vmul.f32 %v924, %v941
    %v943 = vsub.f32 1.0, %v942
    %v944 = vmul.f32 %v941, %v943
    %v945 = vadd.f32 %v941, %v944
    %vm946 = vweird.f32 %v924
    %vm947 = vweird.f32 %v941
    %vm948 = vmor %vm946, %vm947
    %v949 = vsel %vm948, %v941, %v945
    %v950 = vand.u32 2147483647, %v924
    %vm951 = vcmp.eq.f32.partialorder %v950, 8.507059e+37
    %v952 = vand.u32 %v924, 2147483648
    %v953 = vor.u32 1.1754944e-38, %v952
    %v954 = vsel %vm951, %v953, %v949
    %v955 = vmul.f32 1.0, %v954
    %v956 = vrcp.pop %v925
    %v957 = vmul.f32 %v925, %v956
    %v958 = vsub.f32 1.0, %v957
    %v959 = vmul.f32 %v956, %v958
    %v960 = vadd.f32 %v956, %v959
    %vm961 = vweird.f32 %v925
    %vm962 = vweird.f32 %v956
    %vm963 = vmor %vm961, %vm962
    %v964 = vsel %vm963, %v956, %v960
    %v965 = vand.u32 2147483647, %v925
    %vm966 = vcmp.eq.f32.partialorder %v965, 8.507059e+37
    %v967 = vand.u32 %v925, 2147483648
    %v968 = vor.u32 1.1754944e-38, %v967
    %v969 = vsel %vm966, %v968, %v964
    %v970 = vmul.f32 1.0, %v969
    %v971 = vtanh.pop %v913
    %v972 = vmul.f32 %v955, %v785
    %v973 = vmul.f32 %v940, %v971
    %v974 = vadd.f32 %v972, %v973
    %v975 = vtanh.pop %v974
    %v976 = vmul.f32 %v970, %v975
    %v977 = vpack.c.bf16 %v976, %v976
    %978 = vmatpush.bf16.msra.mxu0 %v831
    %979 = vmatpush.bf16.msra.mxu0 %v830
    %980 = vmatpush.bf16.msra.mxu0 %v829
    %981 = vmatpush.bf16.msra.mxu0 %v828
    %982 = vmatpush.bf16.msra.mxu0 %v827
    %983 = vmatpush.bf16.msra.mxu0 %v826
    %984 = vmatpush.bf16.msra.mxu0 %v825
    %985 = vmatpush.bf16.msra.mxu0 %v824
    %986 = vmatmul.bf16.gmra.mxu0 %v977
    %v987 = vpop.f32.mrf.mxu0
    %v988 = vadd.f32 %v790, %v987
    %v989 = vpop.f32.mrf.mxu0
    %990 = vdwg.mxu0
    %991 = vst [vmem:[#allocation8 + $0x8] sm:$0xff] %v988
    %v992 = vld [vmem:[#allocation2 + $0x40] sm:$0xff]
    %v993 = vld [vmem:[#allocation2 + $0x48] sm:$0xff]
    %v994 = vld [vmem:[#allocation2 + $0x50] sm:$0xff]
    %v995 = vld [vmem:[#allocation2 + $0x58] sm:$0xff]
    %996 = vmatpush.bf16.msra.mxu0 %v633
    %997 = vmatpush.bf16.msra.mxu0 %v629
    %998 = vmatpush.bf16.msra.mxu0 %v625
    %999 = vmatpush.bf16.msra.mxu0 %v621
    %1000 = vmatpush.bf16.msra.mxu0 %v617
    %1001 = vmatpush.bf16.msra.mxu0 %v613
    %1002 = vmatpush.bf16.msra.mxu0 %v609
    %1003 = vmatpush.bf16.msra.mxu0 %v605
    %1004 = vmatmul.bf16.gmra.mxu0 %v977
    %v1005 = vpop.f32.mrf.mxu0
    %v1006 = vadd.f32 0.0, %v1005
    %v1007 = vpop.f32.mrf.mxu0
    %1008 = vdwg.mxu0
    %1009 = vmatpush.bf16.msra.mxu0 %v634
    %1010 = vmatpush.bf16.msra.mxu0 %v630
    %1011 = vmatpush.bf16.msra.mxu0 %v626
    %1012 = vmatpush.bf16.msra.mxu0 %v622
    %1013 = vmatpush.bf16.msra.mxu0 %v618
    %1014 = vmatpush.bf16.msra.mxu0 %v614
    %1015 = vmatpush.bf16.msra.mxu0 %v610
    %1016 = vmatpush.bf16.msra.mxu0 %v606
    %1017 = vmatmul.bf16.gmra.mxu0 %v977
    %v1018 = vpop.f32.mrf.mxu0
    %v1019 = vadd.f32 0.0, %v1018
    %v1020 = vpop.f32.mrf.mxu0
    %1021 = vdwg.mxu0
    %1022 = vmatpush.bf16.msra.mxu0 %v635
    %1023 = vmatpush.bf16.msra.mxu0 %v631
    %1024 = vmatpush.bf16.msra.mxu0 %v627
    %1025 = vmatpush.bf16.msra.mxu0 %v623
    %1026 = vmatpush.bf16.msra.mxu0 %v619
    %1027 = vmatpush.bf16.msra.mxu0 %v615
    %1028 = vmatpush.bf16.msra.mxu0 %v611
    %1029 = vmatpush.bf16.msra.mxu0 %v607
    %1030 = vmatmul.bf16.gmra.mxu0 %v977
    %v1031 = vpop.f32.mrf.mxu0
    %v1032 = vadd.f32 0.0, %v1031
    %v1033 = vpop.f32.mrf.mxu0
    %1034 = vdwg.mxu0
    %1035 = vmatpush.bf16.msra.mxu0 %v636
    %1036 = vmatpush.bf16.msra.mxu0 %v632
    %1037 = vmatpush.bf16.msra.mxu0 %v628
    %1038 = vmatpush.bf16.msra.mxu0 %v624
    %1039 = vmatpush.bf16.msra.mxu0 %v620
    %1040 = vmatpush.bf16.msra.mxu0 %v616
    %1041 = vmatpush.bf16.msra.mxu0 %v612
    %1042 = vmatpush.bf16.msra.mxu0 %v608
    %1043 = vmatmul.bf16.gmra.mxu0 %v977
    %v1044 = vpop.f32.mrf.mxu0
    %v1045 = vadd.f32 0.0, %v1044
    %v1046 = vpop.f32.mrf.mxu0
    %1047 = vdwg.mxu0
    %v1048 = vadd.f32 %v992, %v1006
    %v1049 = vadd.f32 %v993, %v1019
    %v1050 = vadd.f32 %v994, %v1032
    %v1051 = vadd.f32 %v995, %v1045
    %v1052 = vxor.u32 %v1048, 2147483648
    %v1053 = vxor.u32 %v1049, 2147483648
    %v1054 = vxor.u32 %v1050, 2147483648
    %v1055 = vmul.f32 %v1052, 1.442695
    %v1056 = vpow.pop %v1055
    %v1057 = vmul.f32 %v1053, 1.442695
    %v1058 = vpow.pop %v1057
    %v1059 = vmul.f32 %v1054, 1.442695
    %v1060 = vpow.pop %v1059
    %v1061 = vadd.f32 %v1056, 1.0
    %v1062 = vadd.f32 %v1058, 1.0
    %v1063 = vadd.f32 %v1060, 1.0
    %v1064 = vrcp.pop %v1061
    %v1065 = vmul.f32 %v1061, %v1064
    %v1066 = vsub.f32 1.0, %v1065
    %v1067 = vmul.f32 %v1064, %v1066
    %v1068 = vadd.f32 %v1064, %v1067
    %vm1069 = vweird.f32 %v1061
    %vm1070 = vweird.f32 %v1064
    %vm1071 = vmor %vm1069, %vm1070
    %v1072 = vsel %vm1071, %v1064, %v1068
    %v1073 = vand.u32 2147483647, %v1061
    %vm1074 = vcmp.eq.f32.partialorder %v1073, 8.507059e+37
    %v1075 = vand.u32 %v1061, 2147483648
    %v1076 = vor.u32 1.1754944e-38, %v1075
    %v1077 = vsel %vm1074, %v1076, %v1072
    %v1078 = vmul.f32 1.0, %v1077
    %v1079 = vrcp.pop %v1062
    %v1080 = vmul.f32 %v1062, %v1079
    %v1081 = vsub.f32 1.0, %v1080
    %v1082 = vmul.f32 %v1079, %v1081
    %v1083 = vadd.f32 %v1079, %v1082
    %vm1084 = vweird.f32 %v1062
    %vm1085 = vweird.f32 %v1079
    %vm1086 = vmor %vm1084, %vm1085
    %v1087 = vsel %vm1086, %v1079, %v1083
    %v1088 = vand.u32 2147483647, %v1062
    %vm1089 = vcmp.eq.f32.partialorder %v1088, 8.507059e+37
    %v1090 = vand.u32 %v1062, 2147483648
    %v1091 = vor.u32 1.1754944e-38, %v1090
    %v1092 = vsel %vm1089, %v1091, %v1087
    %v1093 = vmul.f32 1.0, %v1092
    %v1094 = vrcp.pop %v1063
    %v1095 = vmul.f32 %v1063, %v1094
    %v1096 = vsub.f32 1.0, %v1095
    %v1097 = vmul.f32 %v1094, %v1096
    %v1098 = vadd.f32 %v1094, %v1097
    %vm1099 = vweird.f32 %v1063
    %vm1100 = vweird.f32 %v1094
    %vm1101 = vmor %vm1099, %vm1100
    %v1102 = vsel %vm1101, %v1094, %v1098
    %v1103 = vand.u32 2147483647, %v1063
    %vm1104 = vcmp.eq.f32.partialorder %v1103, 8.507059e+37
    %v1105 = vand.u32 %v1063, 2147483648
    %v1106 = vor.u32 1.1754944e-38, %v1105
    %v1107 = vsel %vm1104, %v1106, %v1102
    %v1108 = vmul.f32 1.0, %v1107
    %v1109 = vtanh.pop %v1051
    %v1110 = vmul.f32 %v1093, %v974
    %v1111 = vmul.f32 %v1078, %v1109
    %v1112 = vadd.f32 %v1110, %v1111
    %v1113 = vtanh.pop %v1112
    %v1114 = vmul.f32 %v1108, %v1113
    %v1115 = vpack.c.bf16 %v1114, %v1114
    %1116 = vmatpush.bf16.msra.mxu0 %v831
    %1117 = vmatpush.bf16.msra.mxu0 %v830
    %1118 = vmatpush.bf16.msra.mxu0 %v829
    %1119 = vmatpush.bf16.msra.mxu0 %v828
    %1120 = vmatpush.bf16.msra.mxu0 %v827
    %1121 = vmatpush.bf16.msra.mxu0 %v826
    %1122 = vmatpush.bf16.msra.mxu0 %v825
    %1123 = vmatpush.bf16.msra.mxu0 %v824
    %1124 = vmatmul.bf16.gmra.mxu0 %v1115
    %v1125 = vpop.f32.mrf.mxu0
    %v1126 = vadd.f32 %v790, %v1125
    %v1127 = vpop.f32.mrf.mxu0
    %1128 = vdwg.mxu0
    %1129 = vst [vmem:[#allocation8 + $0x10] sm:$0xff] %v1126
    %v1130 = vld [vmem:[#allocation2 + $0x60] sm:$0xff]
    %v1131 = vld [vmem:[#allocation2 + $0x68] sm:$0xff]
    %v1132 = vld [vmem:[#allocation2 + $0x70] sm:$0xff]
    %v1133 = vld [vmem:[#allocation2 + $0x78] sm:$0xff]
    %1134 = vmatpush.bf16.msra.mxu0 %v633
    %1135 = vmatpush.bf16.msra.mxu0 %v629
    %1136 = vmatpush.bf16.msra.mxu0 %v625
    %1137 = vmatpush.bf16.msra.mxu0 %v621
    %1138 = vmatpush.bf16.msra.mxu0 %v617
    %1139 = vmatpush.bf16.msra.mxu0 %v613
    %1140 = vmatpush.bf16.msra.mxu0 %v609
    %1141 = vmatpush.bf16.msra.mxu0 %v605
    %1142 = vmatmul.bf16.gmra.mxu0 %v1115
    %v1143 = vpop.f32.mrf.mxu0
    %v1144 = vadd.f32 0.0, %v1143
    %v1145 = vpop.f32.mrf.mxu0
    %1146 = vdwg.mxu0
    %1147 = vmatpush.bf16.msra.mxu0 %v634
    %1148 = vmatpush.bf16.msra.mxu0 %v630
    %1149 = vmatpush.bf16.msra.mxu0 %v626
    %1150 = vmatpush.bf16.msra.mxu0 %v622
    %1151 = vmatpush.bf16.msra.mxu0 %v618
    %1152 = vmatpush.bf16.msra.mxu0 %v614
    %1153 = vmatpush.bf16.msra.mxu0 %v610
    %1154 = vmatpush.bf16.msra.mxu0 %v606
    %1155 = vmatmul.bf16.gmra.mxu0 %v1115
    %v1156 = vpop.f32.mrf.mxu0
    %v1157 = vadd.f32 0.0, %v1156
    %v1158 = vpop.f32.mrf.mxu0
    %1159 = vdwg.mxu0
    %1160 = vmatpush.bf16.msra.mxu0 %v635
    %1161 = vmatpush.bf16.msra.mxu0 %v631
    %1162 = vmatpush.bf16.msra.mxu0 %v627
    %1163 = vmatpush.bf16.msra.mxu0 %v623
    %1164 = vmatpush.bf16.msra.mxu0 %v619
    %1165 = vmatpush.bf16.msra.mxu0 %v615
    %1166 = vmatpush.bf16.msra.mxu0 %v611
    %1167 = vmatpush.bf16.msra.mxu0 %v607
    %1168 = vmatmul.bf16.gmra.mxu0 %v1115
    %v1169 = vpop.f32.mrf.mxu0
    %v1170 = vadd.f32 0.0, %v1169
    %v1171 = vpop.f32.mrf.mxu0
    %1172 = vdwg.mxu0
    %1173 = vmatpush.bf16.msra.mxu0 %v636
    %1174 = vmatpush.bf16.msra.mxu0 %v632
    %1175 = vmatpush.bf16.msra.mxu0 %v628
    %1176 = vmatpush.bf16.msra.mxu0 %v624
    %1177 = vmatpush.bf16.msra.mxu0 %v620
    %1178 = vmatpush.bf16.msra.mxu0 %v616
    %1179 = vmatpush.bf16.msra.mxu0 %v612
    %1180 = vmatpush.bf16.msra.mxu0 %v608
    %1181 = vmatmul.bf16.gmra.mxu0 %v1115
    %v1182 = vpop.f32.mrf.mxu0
    %v1183 = vadd.f32 0.0, %v1182
    %v1184 = vpop.f32.mrf.mxu0
    %1185 = vdwg.mxu0
    %v1186 = vadd.f32 %v1130, %v1144
    %v1187 = vadd.f32 %v1131, %v1157
    %v1188 = vadd.f32 %v1132, %v1170
    %v1189 = vadd.f32 %v1133, %v1183
    %v1190 = vxor.u32 %v1186, 2147483648
    %v1191 = vxor.u32 %v1187, 2147483648
    %v1192 = vxor.u32 %v1188, 2147483648
    %v1193 = vmul.f32 %v1190, 1.442695
    %v1194 = vpow.pop %v1193
    %v1195 = vmul.f32 %v1191, 1.442695
    %v1196 = vpow.pop %v1195
    %v1197 = vmul.f32 %v1192, 1.442695
    %v1198 = vpow.pop %v1197
    %v1199 = vadd.f32 %v1194, 1.0
    %v1200 = vadd.f32 %v1196, 1.0
    %v1201 = vadd.f32 %v1198, 1.0
    %v1202 = vrcp.pop %v1199
    %v1203 = vmul.f32 %v1199, %v1202
    %v1204 = vsub.f32 1.0, %v1203
    %v1205 = vmul.f32 %v1202, %v1204
    %v1206 = vadd.f32 %v1202, %v1205
    %vm1207 = vweird.f32 %v1199
    %vm1208 = vweird.f32 %v1202
    %vm1209 = vmor %vm1207, %vm1208
    %v1210 = vsel %vm1209, %v1202, %v1206
    %v1211 = vand.u32 2147483647, %v1199
    %vm1212 = vcmp.eq.f32.partialorder %v1211, 8.507059e+37
    %v1213 = vand.u32 %v1199, 2147483648
    %v1214 = vor.u32 1.1754944e-38, %v1213
    %v1215 = vsel %vm1212, %v1214, %v1210
    %v1216 = vmul.f32 1.0, %v1215
    %v1217 = vrcp.pop %v1200
    %v1218 = vmul.f32 %v1200, %v1217
    %v1219 = vsub.f32 1.0, %v1218
    %v1220 = vmul.f32 %v1217, %v1219
    %v1221 = vadd.f32 %v1217, %v1220
    %vm1222 = vweird.f32 %v1200
    %vm1223 = vweird.f32 %v1217
    %vm1224 = vmor %vm1222, %vm1223
    %v1225 = vsel %vm1224, %v1217, %v1221
    %v1226 = vand.u32 2147483647, %v1200
    %vm1227 = vcmp.eq.f32.partialorder %v1226, 8.507059e+37
    %v1228 = vand.u32 %v1200, 2147483648
    %v1229 = vor.u32 1.1754944e-38, %v1228
    %v1230 = vsel %vm1227, %v1229, %v1225
    %v1231 = vmul.f32 1.0, %v1230
    %v1232 = vrcp.pop %v1201
    %v1233 = vmul.f32 %v1201, %v1232
    %v1234 = vsub.f32 1.0, %v1233
    %v1235 = vmul.f32 %v1232, %v1234
    %v1236 = vadd.f32 %v1232, %v1235
    %vm1237 = vweird.f32 %v1201
    %vm1238 = vweird.f32 %v1232
    %vm1239 = vmor %vm1237, %vm1238
    %v1240 = vsel %vm1239, %v1232, %v1236
    %v1241 = vand.u32 2147483647, %v1201
    %vm1242 = vcmp.eq.f32.partialorder %v1241, 8.507059e+37
    %v1243 = vand.u32 %v1201, 2147483648
    %v1244 = vor.u32 1.1754944e-38, %v1243
    %v1245 = vsel %vm1242, %v1244, %v1240
    %v1246 = vmul.f32 1.0, %v1245
    %v1247 = vtanh.pop %v1189
    %v1248 = vmul.f32 %v1231, %v1112
    %v1249 = vmul.f32 %v1216, %v1247
    %v1250 = vadd.f32 %v1248, %v1249
    %v1251 = vtanh.pop %v1250
    %v1252 = vmul.f32 %v1246, %v1251
    %v1253 = vpack.c.bf16 %v1252, %v1252
    %1254 = vmatpush.bf16.msra.mxu0 %v831
    %1255 = vmatpush.bf16.msra.mxu0 %v830
    %1256 = vmatpush.bf16.msra.mxu0 %v829
    %1257 = vmatpush.bf16.msra.mxu0 %v828
    %1258 = vmatpush.bf16.msra.mxu0 %v827
    %1259 = vmatpush.bf16.msra.mxu0 %v826
    %1260 = vmatpush.bf16.msra.mxu0 %v825
    %1261 = vmatpush.bf16.msra.mxu0 %v824
    %1262 = vmatmul.bf16.gmra.mxu0 %v1253
    %v1263 = vpop.f32.mrf.mxu0
    %v1264 = vadd.f32 %v790, %v1263
    %v1265 = vpop.f32.mrf.mxu0
    %1266 = vdwg.mxu0
    %1267 = vst [vmem:[#allocation8 + $0x18] sm:$0xff] %v1264
    %v1268 = vld [vmem:[#allocation2 + $0x80] sm:$0xff]
    %v1269 = vld [vmem:[#allocation2 + $0x88] sm:$0xff]
    %v1270 = vld [vmem:[#allocation2 + $0x90] sm:$0xff]
    %v1271 = vld [vmem:[#allocation2 + $0x98] sm:$0xff]
    %1272 = vmatpush.bf16.msra.mxu0 %v633
    %1273 = vmatpush.bf16.msra.mxu0 %v629
    %1274 = vmatpush.bf16.msra.mxu0 %v625
    %1275 = vmatpush.bf16.msra.mxu0 %v621
    %1276 = vmatpush.bf16.msra.mxu0 %v617
    %1277 = vmatpush.bf16.msra.mxu0 %v613
    %1278 = vmatpush.bf16.msra.mxu0 %v609
    %1279 = vmatpush.bf16.msra.mxu0 %v605
    %1280 = vmatmul.bf16.gmra.mxu0 %v1253
    %v1281 = vpop.f32.mrf.mxu0
    %v1282 = vadd.f32 0.0, %v1281
    %v1283 = vpop.f32.mrf.mxu0
    %1284 = vdwg.mxu0
    %1285 = vmatpush.bf16.msra.mxu0 %v634
    %1286 = vmatpush.bf16.msra.mxu0 %v630
    %1287 = vmatpush.bf16.msra.mxu0 %v626
    %1288 = vmatpush.bf16.msra.mxu0 %v622
    %1289 = vmatpush.bf16.msra.mxu0 %v618
    %1290 = vmatpush.bf16.msra.mxu0 %v614
    %1291 = vmatpush.bf16.msra.mxu0 %v610
    %1292 = vmatpush.bf16.msra.mxu0 %v606
    %1293 = vmatmul.bf16.gmra.mxu0 %v1253
    %v1294 = vpop.f32.mrf.mxu0
    %v1295 = vadd.f32 0.0, %v1294
    %v1296 = vpop.f32.mrf.mxu0
    %1297 = vdwg.mxu0
    %1298 = vmatpush.bf16.msra.mxu0 %v635
    %1299 = vmatpush.bf16.msra.mxu0 %v631
    %1300 = vmatpush.bf16.msra.mxu0 %v627
    %1301 = vmatpush.bf16.msra.mxu0 %v623
    %1302 = vmatpush.bf16.msra.mxu0 %v619
    %1303 = vmatpush.bf16.msra.mxu0 %v615
    %1304 = vmatpush.bf16.msra.mxu0 %v611
    %1305 = vmatpush.bf16.msra.mxu0 %v607
    %1306 = vmatmul.bf16.gmra.mxu0 %v1253
    %v1307 = vpop.f32.mrf.mxu0
    %v1308 = vadd.f32 0.0, %v1307
    %v1309 = vpop.f32.mrf.mxu0
    %1310 = vdwg.mxu0
    %1311 = vmatpush.bf16.msra.mxu0 %v636
    %1312 = vmatpush.bf16.msra.mxu0 %v632
    %1313 = vmatpush.bf16.msra.mxu0 %v628
    %1314 = vmatpush.bf16.msra.mxu0 %v624
    %1315 = vmatpush.bf16.msra.mxu0 %v620
    %1316 = vmatpush.bf16.msra.mxu0 %v616
    %1317 = vmatpush.bf16.msra.mxu0 %v612
    %1318 = vmatpush.bf16.msra.mxu0 %v608
    %1319 = vmatmul.bf16.gmra.mxu0 %v1253
    %v1320 = vpop.f32.mrf.mxu0
    %v1321 = vadd.f32 0.0, %v1320
    %v1322 = vpop.f32.mrf.mxu0
    %1323 = vdwg.mxu0
    %v1324 = vadd.f32 %v1268, %v1282
    %v1325 = vadd.f32 %v1269, %v1295
    %v1326 = vadd.f32 %v1270, %v1308
    %v1327 = vadd.f32 %v1271, %v1321
    %v1328 = vxor.u32 %v1324, 2147483648
    %v1329 = vxor.u32 %v1325, 2147483648
    %v1330 = vxor.u32 %v1326, 2147483648
    %v1331 = vmul.f32 %v1328, 1.442695
    %v1332 = vpow.pop %v1331
    %v1333 = vmul.f32 %v1329, 1.442695
    %v1334 = vpow.pop %v1333
    %v1335 = vmul.f32 %v1330, 1.442695
    %v1336 = vpow.pop %v1335
    %v1337 = vadd.f32 %v1332, 1.0
    %v1338 = vadd.f32 %v1334, 1.0
    %v1339 = vadd.f32 %v1336, 1.0
    %v1340 = vrcp.pop %v1337
    %v1341 = vmul.f32 %v1337, %v1340
    %v1342 = vsub.f32 1.0, %v1341
    %v1343 = vmul.f32 %v1340, %v1342
    %v1344 = vadd.f32 %v1340, %v1343
    %vm1345 = vweird.f32 %v1337
    %vm1346 = vweird.f32 %v1340
    %vm1347 = vmor %vm1345, %vm1346
    %v1348 = vsel %vm1347, %v1340, %v1344
    %v1349 = vand.u32 2147483647, %v1337
    %vm1350 = vcmp.eq.f32.partialorder %v1349, 8.507059e+37
    %v1351 = vand.u32 %v1337, 2147483648
    %v1352 = vor.u32 1.1754944e-38, %v1351
    %v1353 = vsel %vm1350, %v1352, %v1348
    %v1354 = vmul.f32 1.0, %v1353
    %v1355 = vrcp.pop %v1338
    %v1356 = vmul.f32 %v1338, %v1355
    %v1357 = vsub.f32 1.0, %v1356
    %v1358 = vmul.f32 %v1355, %v1357
    %v1359 = vadd.f32 %v1355, %v1358
    %vm1360 = vweird.f32 %v1338
    %vm1361 = vweird.f32 %v1355
    %vm1362 = vmor %vm1360, %vm1361
    %v1363 = vsel %vm1362, %v1355, %v1359
    %v1364 = vand.u32 2147483647, %v1338
    %vm1365 = vcmp.eq.f32.partialorder %v1364, 8.507059e+37
    %v1366 = vand.u32 %v1338, 2147483648
    %v1367 = vor.u32 1.1754944e-38, %v1366
    %v1368 = vsel %vm1365, %v1367, %v1363
    %v1369 = vmul.f32 1.0, %v1368
    %v1370 = vrcp.pop %v1339
    %v1371 = vmul.f32 %v1339, %v1370
    %v1372 = vsub.f32 1.0, %v1371
    %v1373 = vmul.f32 %v1370, %v1372
    %v1374 = vadd.f32 %v1370, %v1373
    %vm1375 = vweird.f32 %v1339
    %vm1376 = vweird.f32 %v1370
    %vm1377 = vmor %vm1375, %vm1376
    %v1378 = vsel %vm1377, %v1370, %v1374
    %v1379 = vand.u32 2147483647, %v1339
    %vm1380 = vcmp.eq.f32.partialorder %v1379, 8.507059e+37
    %v1381 = vand.u32 %v1339, 2147483648
    %v1382 = vor.u32 1.1754944e-38, %v1381
    %v1383 = vsel %vm1380, %v1382, %v1378
    %v1384 = vmul.f32 1.0, %v1383
    %v1385 = vtanh.pop %v1327
    %v1386 = vmul.f32 %v1369, %v1250
    %v1387 = vmul.f32 %v1354, %v1385
    %v1388 = vadd.f32 %v1386, %v1387
    %v1389 = vtanh.pop %v1388
    %v1390 = vmul.f32 %v1384, %v1389
    %v1391 = vpack.c.bf16 %v1390, %v1390
    %1392 = vmatpush.bf16.msra.mxu0 %v831
    %1393 = vmatpush.bf16.msra.mxu0 %v830
    %1394 = vmatpush.bf16.msra.mxu0 %v829
    %1395 = vmatpush.bf16.msra.mxu0 %v828
    %1396 = vmatpush.bf16.msra.mxu0 %v827
    %1397 = vmatpush.bf16.msra.mxu0 %v826
    %1398 = vmatpush.bf16.msra.mxu0 %v825
    %1399 = vmatpush.bf16.msra.mxu0 %v824
    %1400 = vmatmul.bf16.gmra.mxu0 %v1391
    %v1401 = vpop.f32.mrf.mxu0
    %v1402 = vadd.f32 %v790, %v1401
    %v1403 = vpop.f32.mrf.mxu0
    %1404 = vdwg.mxu0
    %1405 = vst [vmem:[#allocation8 + $0x20] sm:$0xff] %v1402
    %v1406 = vld [vmem:[#allocation2 + $0xa0] sm:$0xff]
    %v1407 = vld [vmem:[#allocation2 + $0xa8] sm:$0xff]
    %v1408 = vld [vmem:[#allocation2 + $0xb0] sm:$0xff]
    %v1409 = vld [vmem:[#allocation2 + $0xb8] sm:$0xff]
    %1410 = vmatpush.bf16.msra.mxu0 %v633
    %1411 = vmatpush.bf16.msra.mxu0 %v629
    %1412 = vmatpush.bf16.msra.mxu0 %v625
    %1413 = vmatpush.bf16.msra.mxu0 %v621
    %1414 = vmatpush.bf16.msra.mxu0 %v617
    %1415 = vmatpush.bf16.msra.mxu0 %v613
    %1416 = vmatpush.bf16.msra.mxu0 %v609
    %1417 = vmatpush.bf16.msra.mxu0 %v605
    %1418 = vmatmul.bf16.gmra.mxu0 %v1391
    %v1419 = vpop.f32.mrf.mxu0
    %v1420 = vadd.f32 0.0, %v1419
    %v1421 = vpop.f32.mrf.mxu0
    %1422 = vdwg.mxu0
    %1423 = vmatpush.bf16.msra.mxu0 %v634
    %1424 = vmatpush.bf16.msra.mxu0 %v630
    %1425 = vmatpush.bf16.msra.mxu0 %v626
    %1426 = vmatpush.bf16.msra.mxu0 %v622
    %1427 = vmatpush.bf16.msra.mxu0 %v618
    %1428 = vmatpush.bf16.msra.mxu0 %v614
    %1429 = vmatpush.bf16.msra.mxu0 %v610
    %1430 = vmatpush.bf16.msra.mxu0 %v606
    %1431 = vmatmul.bf16.gmra.mxu0 %v1391
    %v1432 = vpop.f32.mrf.mxu0
    %v1433 = vadd.f32 0.0, %v1432
    %v1434 = vpop.f32.mrf.mxu0
    %1435 = vdwg.mxu0
    %1436 = vmatpush.bf16.msra.mxu0 %v635
    %1437 = vmatpush.bf16.msra.mxu0 %v631
    %1438 = vmatpush.bf16.msra.mxu0 %v627
    %1439 = vmatpush.bf16.msra.mxu0 %v623
    %1440 = vmatpush.bf16.msra.mxu0 %v619
    %1441 = vmatpush.bf16.msra.mxu0 %v615
    %1442 = vmatpush.bf16.msra.mxu0 %v611
    %1443 = vmatpush.bf16.msra.mxu0 %v607
    %1444 = vmatmul.bf16.gmra.mxu0 %v1391
    %v1445 = vpop.f32.mrf.mxu0
    %v1446 = vadd.f32 0.0, %v1445
    %v1447 = vpop.f32.mrf.mxu0
    %1448 = vdwg.mxu0
    %1449 = vmatpush.bf16.msra.mxu0 %v636
    %1450 = vmatpush.bf16.msra.mxu0 %v632
    %1451 = vmatpush.bf16.msra.mxu0 %v628
    %1452 = vmatpush.bf16.msra.mxu0 %v624
    %1453 = vmatpush.bf16.msra.mxu0 %v620
    %1454 = vmatpush.bf16.msra.mxu0 %v616
    %1455 = vmatpush.bf16.msra.mxu0 %v612
    %1456 = vmatpush.bf16.msra.mxu0 %v608
    %1457 = vmatmul.bf16.gmra.mxu0 %v1391
    %v1458 = vpop.f32.mrf.mxu0
    %v1459 = vadd.f32 0.0, %v1458
    %v1460 = vpop.f32.mrf.mxu0
    %1461 = vdwg.mxu0
    %v1462 = vadd.f32 %v1406, %v1420
    %v1463 = vadd.f32 %v1407, %v1433
    %v1464 = vadd.f32 %v1408, %v1446
    %v1465 = vadd.f32 %v1409, %v1459
    %v1466 = vxor.u32 %v1462, 2147483648
    %v1467 = vxor.u32 %v1463, 2147483648
    %v1468 = vxor.u32 %v1464, 2147483648
    %v1469 = vmul.f32 %v1466, 1.442695
    %v1470 = vpow.pop %v1469
    %v1471 = vmul.f32 %v1467, 1.442695
    %v1472 = vpow.pop %v1471
    %v1473 = vmul.f32 %v1468, 1.442695
    %v1474 = vpow.pop %v1473
    %v1475 = vadd.f32 %v1470, 1.0
    %v1476 = vadd.f32 %v1472, 1.0
    %v1477 = vadd.f32 %v1474, 1.0
    %v1478 = vrcp.pop %v1475
    %v1479 = vmul.f32 %v1475, %v1478
    %v1480 = vsub.f32 1.0, %v1479
    %v1481 = vmul.f32 %v1478, %v1480
    %v1482 = vadd.f32 %v1478, %v1481
    %vm1483 = vweird.f32 %v1475
    %vm1484 = vweird.f32 %v1478
    %vm1485 = vmor %vm1483, %vm1484
    %v1486 = vsel %vm1485, %v1478, %v1482
    %v1487 = vand.u32 2147483647, %v1475
    %vm1488 = vcmp.eq.f32.partialorder %v1487, 8.507059e+37
    %v1489 = vand.u32 %v1475, 2147483648
    %v1490 = vor.u32 1.1754944e-38, %v1489
    %v1491 = vsel %vm1488, %v1490, %v1486
    %v1492 = vmul.f32 1.0, %v1491
    %v1493 = vrcp.pop %v1476
    %v1494 = vmul.f32 %v1476, %v1493
    %v1495 = vsub.f32 1.0, %v1494
    %v1496 = vmul.f32 %v1493, %v1495
    %v1497 = vadd.f32 %v1493, %v1496
    %vm1498 = vweird.f32 %v1476
    %vm1499 = vweird.f32 %v1493
    %vm1500 = vmor %vm1498, %vm1499
    %v1501 = vsel %vm1500, %v1493, %v1497
    %v1502 = vand.u32 2147483647, %v1476
    %vm1503 = vcmp.eq.f32.partialorder %v1502, 8.507059e+37
    %v1504 = vand.u32 %v1476, 2147483648
    %v1505 = vor.u32 1.1754944e-38, %v1504
    %v1506 = vsel %vm1503, %v1505, %v1501
    %v1507 = vmul.f32 1.0, %v1506
    %v1508 = vrcp.pop %v1477
    %v1509 = vmul.f32 %v1477, %v1508
    %v1510 = vsub.f32 1.0, %v1509
    %v1511 = vmul.f32 %v1508, %v1510
    %v1512 = vadd.f32 %v1508, %v1511
    %vm1513 = vweird.f32 %v1477
    %vm1514 = vweird.f32 %v1508
    %vm1515 = vmor %vm1513, %vm1514
    %v1516 = vsel %vm1515, %v1508, %v1512
    %v1517 = vand.u32 2147483647, %v1477
    %vm1518 = vcmp.eq.f32.partialorder %v1517, 8.507059e+37
    %v1519 = vand.u32 %v1477, 2147483648
    %v1520 = vor.u32 1.1754944e-38, %v1519
    %v1521 = vsel %vm1518, %v1520, %v1516
    %v1522 = vmul.f32 1.0, %v1521
    %v1523 = vtanh.pop %v1465
    %v1524 = vmul.f32 %v1507, %v1388
    %v1525 = vmul.f32 %v1492, %v1523
    %v1526 = vadd.f32 %v1524, %v1525
    %v1527 = vtanh.pop %v1526
    %v1528 = vmul.f32 %v1522, %v1527
    %v1529 = vpack.c.bf16 %v1528, %v1528
    %1530 = vmatpush.bf16.msra.mxu0 %v831
    %1531 = vmatpush.bf16.msra.mxu0 %v830
    %1532 = vmatpush.bf16.msra.mxu0 %v829
    %1533 = vmatpush.bf16.msra.mxu0 %v828
    %1534 = vmatpush.bf16.msra.mxu0 %v827
    %1535 = vmatpush.bf16.msra.mxu0 %v826
    %1536 = vmatpush.bf16.msra.mxu0 %v825
    %1537 = vmatpush.bf16.msra.mxu0 %v824
    %1538 = vmatmul.bf16.gmra.mxu0 %v1529
    %v1539 = vpop.f32.mrf.mxu0
    %v1540 = vadd.f32 %v790, %v1539
    %v1541 = vpop.f32.mrf.mxu0
    %1542 = vdwg.mxu0
    %1543 = vst [vmem:[#allocation8 + $0x28] sm:$0xff] %v1540
    %v1544 = vld [vmem:[#allocation2 + $0xc0] sm:$0xff]
    %v1545 = vld [vmem:[#allocation2 + $0xc8] sm:$0xff]
    %v1546 = vld [vmem:[#allocation2 + $0xd0] sm:$0xff]
    %v1547 = vld [vmem:[#allocation2 + $0xd8] sm:$0xff]
    %1548 = vmatpush.bf16.msra.mxu0 %v633
    %1549 = vmatpush.bf16.msra.mxu0 %v629
    %1550 = vmatpush.bf16.msra.mxu0 %v625
    %1551 = vmatpush.bf16.msra.mxu0 %v621
    %1552 = vmatpush.bf16.msra.mxu0 %v617
    %1553 = vmatpush.bf16.msra.mxu0 %v613
    %1554 = vmatpush.bf16.msra.mxu0 %v609
    %1555 = vmatpush.bf16.msra.mxu0 %v605
    %1556 = vmatmul.bf16.gmra.mxu0 %v1529
    %v1557 = vpop.f32.mrf.mxu0
    %v1558 = vadd.f32 0.0, %v1557
    %v1559 = vpop.f32.mrf.mxu0
    %1560 = vdwg.mxu0
    %1561 = vmatpush.bf16.msra.mxu0 %v634
    %1562 = vmatpush.bf16.msra.mxu0 %v630
    %1563 = vmatpush.bf16.msra.mxu0 %v626
    %1564 = vmatpush.bf16.msra.mxu0 %v622
    %1565 = vmatpush.bf16.msra.mxu0 %v618
    %1566 = vmatpush.bf16.msra.mxu0 %v614
    %1567 = vmatpush.bf16.msra.mxu0 %v610
    %1568 = vmatpush.bf16.msra.mxu0 %v606
    %1569 = vmatmul.bf16.gmra.mxu0 %v1529
    %v1570 = vpop.f32.mrf.mxu0
    %v1571 = vadd.f32 0.0, %v1570
    %v1572 = vpop.f32.mrf.mxu0
    %1573 = vdwg.mxu0
    %1574 = vmatpush.bf16.msra.mxu0 %v635
    %1575 = vmatpush.bf16.msra.mxu0 %v631
    %1576 = vmatpush.bf16.msra.mxu0 %v627
    %1577 = vmatpush.bf16.msra.mxu0 %v623
    %1578 = vmatpush.bf16.msra.mxu0 %v619
    %1579 = vmatpush.bf16.msra.mxu0 %v615
    %1580 = vmatpush.bf16.msra.mxu0 %v611
    %1581 = vmatpush.bf16.msra.mxu0 %v607
    %1582 = vmatmul.bf16.gmra.mxu0 %v1529
    %v1583 = vpop.f32.mrf.mxu0
    %v1584 = vadd.f32 0.0, %v1583
    %v1585 = vpop.f32.mrf.mxu0
    %1586 = vdwg.mxu0
    %1587 = vmatpush.bf16.msra.mxu0 %v636
    %1588 = vmatpush.bf16.msra.mxu0 %v632
    %1589 = vmatpush.bf16.msra.mxu0 %v628
    %1590 = vmatpush.bf16.msra.mxu0 %v624
    %1591 = vmatpush.bf16.msra.mxu0 %v620
    %1592 = vmatpush.bf16.msra.mxu0 %v616
    %1593 = vmatpush.bf16.msra.mxu0 %v612
    %1594 = vmatpush.bf16.msra.mxu0 %v608
    %1595 = vmatmul.bf16.gmra.mxu0 %v1529
    %v1596 = vpop.f32.mrf.mxu0
    %v1597 = vadd.f32 0.0, %v1596
    %v1598 = vpop.f32.mrf.mxu0
    %1599 = vdwg.mxu0
    %v1600 = vadd.f32 %v1544, %v1558
    %v1601 = vadd.f32 %v1545, %v1571
    %v1602 = vadd.f32 %v1546, %v1584
    %v1603 = vadd.f32 %v1547, %v1597
    %v1604 = vxor.u32 %v1600, 2147483648
    %v1605 = vxor.u32 %v1601, 2147483648
    %v1606 = vxor.u32 %v1602, 2147483648
    %v1607 = vmul.f32 %v1604, 1.442695
    %v1608 = vpow.pop %v1607
    %v1609 = vmul.f32 %v1605, 1.442695
    %v1610 = vpow.pop %v1609
    %v1611 = vmul.f32 %v1606, 1.442695
    %v1612 = vpow.pop %v1611
    %v1613 = vadd.f32 %v1608, 1.0
    %v1614 = vadd.f32 %v1610, 1.0
    %v1615 = vadd.f32 %v1612, 1.0
    %v1616 = vrcp.pop %v1613
    %v1617 = vmul.f32 %v1613, %v1616
    %v1618 = vsub.f32 1.0, %v1617
    %v1619 = vmul.f32 %v1616, %v1618
    %v1620 = vadd.f32 %v1616, %v1619
    %vm1621 = vweird.f32 %v1613
    %vm1622 = vweird.f32 %v1616
    %vm1623 = vmor %vm1621, %vm1622
    %v1624 = vsel %vm1623, %v1616, %v1620
    %v1625 = vand.u32 2147483647, %v1613
    %vm1626 = vcmp.eq.f32.partialorder %v1625, 8.507059e+37
    %v1627 = vand.u32 %v1613, 2147483648
    %v1628 = vor.u32 1.1754944e-38, %v1627
    %v1629 = vsel %vm1626, %v1628, %v1624
    %v1630 = vmul.f32 1.0, %v1629
    %v1631 = vrcp.pop %v1614
    %v1632 = vmul.f32 %v1614, %v1631
    %v1633 = vsub.f32 1.0, %v1632
    %v1634 = vmul.f32 %v1631, %v1633
    %v1635 = vadd.f32 %v1631, %v1634
    %vm1636 = vweird.f32 %v1614
    %vm1637 = vweird.f32 %v1631
    %vm1638 = vmor %vm1636, %vm1637
    %v1639 = vsel %vm1638, %v1631, %v1635
    %v1640 = vand.u32 2147483647, %v1614
    %vm1641 = vcmp.eq.f32.partialorder %v1640, 8.507059e+37
    %v1642 = vand.u32 %v1614, 2147483648
    %v1643 = vor.u32 1.1754944e-38, %v1642
    %v1644 = vsel %vm1641, %v1643, %v1639
    %v1645 = vmul.f32 1.0, %v1644
    %v1646 = vrcp.pop %v1615
    %v1647 = vmul.f32 %v1615, %v1646
    %v1648 = vsub.f32 1.0, %v1647
    %v1649 = vmul.f32 %v1646, %v1648
    %v1650 = vadd.f32 %v1646, %v1649
    %vm1651 = vweird.f32 %v1615
    %vm1652 = vweird.f32 %v1646
    %vm1653 = vmor %vm1651, %vm1652
    %v1654 = vsel %vm1653, %v1646, %v1650
    %v1655 = vand.u32 2147483647, %v1615
    %vm1656 = vcmp.eq.f32.partialorder %v1655, 8.507059e+37
    %v1657 = vand.u32 %v1615, 2147483648
    %v1658 = vor.u32 1.1754944e-38, %v1657
    %v1659 = vsel %vm1656, %v1658, %v1654
    %v1660 = vmul.f32 1.0, %v1659
    %v1661 = vtanh.pop %v1603
    %v1662 = vmul.f32 %v1645, %v1526
    %v1663 = vmul.f32 %v1630, %v1661
    %v1664 = vadd.f32 %v1662, %v1663
    %v1665 = vtanh.pop %v1664
    %v1666 = vmul.f32 %v1660, %v1665
    %v1667 = vpack.c.bf16 %v1666, %v1666
    %1668 = vmatpush.bf16.msra.mxu0 %v831
    %1669 = vmatpush.bf16.msra.mxu0 %v830
    %1670 = vmatpush.bf16.msra.mxu0 %v829
    %1671 = vmatpush.bf16.msra.mxu0 %v828
    %1672 = vmatpush.bf16.msra.mxu0 %v827
    %1673 = vmatpush.bf16.msra.mxu0 %v826
    %1674 = vmatpush.bf16.msra.mxu0 %v825
    %1675 = vmatpush.bf16.msra.mxu0 %v824
    %1676 = vmatmul.bf16.gmra.mxu0 %v1667
    %v1677 = vpop.f32.mrf.mxu0
    %v1678 = vadd.f32 %v790, %v1677
    %v1679 = vpop.f32.mrf.mxu0
    %1680 = vdwg.mxu0
    %1681 = vst [vmem:[#allocation8 + $0x30] sm:$0xff] %v1678
    %v1682 = vld [vmem:[#allocation2 + $0xe0] sm:$0xff]
    %v1683 = vld [vmem:[#allocation2 + $0xe8] sm:$0xff]
    %v1684 = vld [vmem:[#allocation2 + $0xf0] sm:$0xff]
    %v1685 = vld [vmem:[#allocation2 + $0xf8] sm:$0xff]
    %1686 = vmatpush.bf16.msra.mxu0 %v633
    %1687 = vmatpush.bf16.msra.mxu0 %v629
    %1688 = vmatpush.bf16.msra.mxu0 %v625
    %1689 = vmatpush.bf16.msra.mxu0 %v621
    %1690 = vmatpush.bf16.msra.mxu0 %v617
    %1691 = vmatpush.bf16.msra.mxu0 %v613
    %1692 = vmatpush.bf16.msra.mxu0 %v609
    %1693 = vmatpush.bf16.msra.mxu0 %v605
    %1694 = vmatmul.bf16.gmra.mxu0 %v1667
    %v1695 = vpop.f32.mrf.mxu0
    %v1696 = vadd.f32 0.0, %v1695
    %v1697 = vpop.f32.mrf.mxu0
    %1698 = vdwg.mxu0
    %1699 = vmatpush.bf16.msra.mxu0 %v634
    %1700 = vmatpush.bf16.msra.mxu0 %v630
    %1701 = vmatpush.bf16.msra.mxu0 %v626
    %1702 = vmatpush.bf16.msra.mxu0 %v622
    %1703 = vmatpush.bf16.msra.mxu0 %v618
    %1704 = vmatpush.bf16.msra.mxu0 %v614
    %1705 = vmatpush.bf16.msra.mxu0 %v610
    %1706 = vmatpush.bf16.msra.mxu0 %v606
    %1707 = vmatmul.bf16.gmra.mxu0 %v1667
    %v1708 = vpop.f32.mrf.mxu0
    %v1709 = vadd.f32 0.0, %v1708
    %v1710 = vpop.f32.mrf.mxu0
    %1711 = vdwg.mxu0
    %1712 = vmatpush.bf16.msra.mxu0 %v635
    %1713 = vmatpush.bf16.msra.mxu0 %v631
    %1714 = vmatpush.bf16.msra.mxu0 %v627
    %1715 = vmatpush.bf16.msra.mxu0 %v623
    %1716 = vmatpush.bf16.msra.mxu0 %v619
    %1717 = vmatpush.bf16.msra.mxu0 %v615
    %1718 = vmatpush.bf16.msra.mxu0 %v611
    %1719 = vmatpush.bf16.msra.mxu0 %v607
    %1720 = vmatmul.bf16.gmra.mxu0 %v1667
    %v1721 = vpop.f32.mrf.mxu0
    %v1722 = vadd.f32 0.0, %v1721
    %v1723 = vpop.f32.mrf.mxu0
    %1724 = vdwg.mxu0
    %1725 = vmatpush.bf16.msra.mxu0 %v636
    %1726 = vmatpush.bf16.msra.mxu0 %v632
    %1727 = vmatpush.bf16.msra.mxu0 %v628
    %1728 = vmatpush.bf16.msra.mxu0 %v624
    %1729 = vmatpush.bf16.msra.mxu0 %v620
    %1730 = vmatpush.bf16.msra.mxu0 %v616
    %1731 = vmatpush.bf16.msra.mxu0 %v612
    %1732 = vmatpush.bf16.msra.mxu0 %v608
    %1733 = vmatmul.bf16.gmra.mxu0 %v1667
    %v1734 = vpop.f32.mrf.mxu0
    %v1735 = vadd.f32 0.0, %v1734
    %v1736 = vpop.f32.mrf.mxu0
    %1737 = vdwg.mxu0
    %v1738 = vadd.f32 %v1682, %v1696
    %v1739 = vadd.f32 %v1683, %v1709
    %v1740 = vadd.f32 %v1684, %v1722
    %v1741 = vadd.f32 %v1685, %v1735
    %v1742 = vxor.u32 %v1738, 2147483648
    %v1743 = vxor.u32 %v1739, 2147483648
    %v1744 = vxor.u32 %v1740, 2147483648
    %v1745 = vmul.f32 %v1742, 1.442695
    %v1746 = vpow.pop %v1745
    %v1747 = vmul.f32 %v1743, 1.442695
    %v1748 = vpow.pop %v1747
    %v1749 = vmul.f32 %v1744, 1.442695
    %v1750 = vpow.pop %v1749
    %v1751 = vadd.f32 %v1746, 1.0
    %v1752 = vadd.f32 %v1748, 1.0
    %v1753 = vadd.f32 %v1750, 1.0
    %v1754 = vrcp.pop %v1751
    %v1755 = vmul.f32 %v1751, %v1754
    %v1756 = vsub.f32 1.0, %v1755
    %v1757 = vmul.f32 %v1754, %v1756
    %v1758 = vadd.f32 %v1754, %v1757
    %vm1759 = vweird.f32 %v1751
    %vm1760 = vweird.f32 %v1754
    %vm1761 = vmor %vm1759, %vm1760
    %v1762 = vsel %vm1761, %v1754, %v1758
    %v1763 = vand.u32 2147483647, %v1751
    %vm1764 = vcmp.eq.f32.partialorder %v1763, 8.507059e+37
    %v1765 = vand.u32 %v1751, 2147483648
    %v1766 = vor.u32 1.1754944e-38, %v1765
    %v1767 = vsel %vm1764, %v1766, %v1762
    %v1768 = vmul.f32 1.0, %v1767
    %v1769 = vrcp.pop %v1752
    %v1770 = vmul.f32 %v1752, %v1769
    %v1771 = vsub.f32 1.0, %v1770
    %v1772 = vmul.f32 %v1769, %v1771
    %v1773 = vadd.f32 %v1769, %v1772
    %vm1774 = vweird.f32 %v1752
    %vm1775 = vweird.f32 %v1769
    %vm1776 = vmor %vm1774, %vm1775
    %v1777 = vsel %vm1776, %v1769, %v1773
    %v1778 = vand.u32 2147483647, %v1752
    %vm1779 = vcmp.eq.f32.partialorder %v1778, 8.507059e+37
    %v1780 = vand.u32 %v1752, 2147483648
    %v1781 = vor.u32 1.1754944e-38, %v1780
    %v1782 = vsel %vm1779, %v1781, %v1777
    %v1783 = vmul.f32 1.0, %v1782
    %v1784 = vrcp.pop %v1753
    %v1785 = vmul.f32 %v1753, %v1784
    %v1786 = vsub.f32 1.0, %v1785
    %v1787 = vmul.f32 %v1784, %v1786
    %v1788 = vadd.f32 %v1784, %v1787
    %vm1789 = vweird.f32 %v1753
    %vm1790 = vweird.f32 %v1784
    %vm1791 = vmor %vm1789, %vm1790
    %v1792 = vsel %vm1791, %v1784, %v1788
    %v1793 = vand.u32 2147483647, %v1753
    %vm1794 = vcmp.eq.f32.partialorder %v1793, 8.507059e+37
    %v1795 = vand.u32 %v1753, 2147483648
    %v1796 = vor.u32 1.1754944e-38, %v1795
    %v1797 = vsel %vm1794, %v1796, %v1792
    %v1798 = vmul.f32 1.0, %v1797
    %v1799 = vtanh.pop %v1741
    %v1800 = vmul.f32 %v1783, %v1664
    %v1801 = vmul.f32 %v1768, %v1799
    %v1802 = vadd.f32 %v1800, %v1801
    %v1803 = vtanh.pop %v1802
    %v1804 = vmul.f32 %v1798, %v1803
    %v1805 = vpack.c.bf16 %v1804, %v1804
    %1806 = vmatpush.bf16.msra.mxu0 %v831
    %1807 = vmatpush.bf16.msra.mxu0 %v830
    %1808 = vmatpush.bf16.msra.mxu0 %v829
    %1809 = vmatpush.bf16.msra.mxu0 %v828
    %1810 = vmatpush.bf16.msra.mxu0 %v827
    %1811 = vmatpush.bf16.msra.mxu0 %v826
    %1812 = vmatpush.bf16.msra.mxu0 %v825
    %1813 = vmatpush.bf16.msra.mxu0 %v824
    %1814 = vmatmul.bf16.gmra.mxu0 %v1805
    %v1815 = vpop.f32.mrf.mxu0
    %v1816 = vadd.f32 %v790, %v1815
    %v1817 = vpop.f32.mrf.mxu0
    %1818 = vdwg.mxu0
    %1819 = vst [vmem:[#allocation8 + $0x38] sm:$0xff] %v1816
    // Predicated region
    $region30: #{tpu_custom_call.1} parent=1 // pred_check
      _
    $region31: #{tpu_custom_call.1} parent=1 // pred_check_branch
      %1821 = sbr.rel (0) target = $region33
    $region32: #{tpu_custom_call.1} parent=1 // pred_region
      %1823 = vsyncadd [#allocation5], 0
      %s1824 = sshll.u32 [#allocation8], 4
      %s1825 = int_to_ptr.vmem [resolvable:$true] %s1824
      %s1826 = sshll.u32 %s5, 4
      %s1827 = int_to_ptr.hbm [resolvable:$true] %s1826
      %1832 = dma.vmem_to_hbm [thread:$0]  %s1825, 1024, %s1827, [#allocation5], 128, 128, 8
    $region33: #{tpu_custom_call.1} parent=1 // pred_fallthru
      _
    // Predicated region
    $region34: #{tpu_custom_call.1} parent=1 // pred_check
      _
    $region35: #{tpu_custom_call.1} parent=1 // pred_check_branch
      %1834 = sbr.rel (0) target = $region37
    $region36: #{tpu_custom_call.1} parent=1 // pred_region
      %1836 = dma.done [#allocation5], 1024
    $region37: #{tpu_custom_call.1} parent=1 // pred_fallthru
      _
    %1837 = vsyncpa [#allocation4], 1
    %1838 = vsyncpa [#allocation7], 1
    %1839 = vsyncpa [#allocation5], 1

</llo_original>
